<compile_context>
chip_gen: v7x
topology: tpu7x:2x2x1
jax: 0.10.0
libtpu: 0.0.40
codegen_flags: <defaults>
</compile_context>

<pallas_src>
import functools
import math

import jax
import jax.numpy as jnp
from jax.experimental import pallas as pl
from jax.experimental.pallas import tpu as pltpu

VMEM = pltpu.MemorySpace.VMEM


def _vmem_specs(n):
    return [pl.BlockSpec(memory_space=VMEM) for _ in range(n)]


def _ln(v, g, b, eps):
    mu = jnp.mean(v, axis=-1, keepdims=True)
    var = jnp.mean(jnp.square(v - mu), axis=-1, keepdims=True)
    return (v - mu) * jax.lax.rsqrt(var + eps) * g + b


# ----------------------------------------------------------------------------
# Single fused kernel: input LN + masked mean-pool -> EncoderLayer (pre-LN
# MHSA + linear FFN, eval-mode dropout) -> final LN -> embed LN -> out Linear.
# ----------------------------------------------------------------------------
def fused_transformer_kernel(x_ref, len_ref, ing_ref, inb_ref,
                             wqkv_ref, bqkv_ref, wo_ref, bo_ref,
                             ln1g_ref, ln1b_ref, ln2g_ref, ln2b_ref,
                             wf_ref, bf_ref,
                             fing_ref, finb_ref, embg_ref, embb_ref,
                             wout_ref, bout_ref, o_ref, *, n_head, eps):
    B, T, D = x_ref.shape
    H = n_head
    dh = D // H

    # ---- 1) input LayerNorm + masked mean-pool over time ----
    # mask is built in-kernel from input_lengths (no HBM mask stream).
    x = x_ref[...].astype(jnp.float32)                              # (B, T, D)
    y = _ln(x, ing_ref[...], inb_ref[...], eps)                     # (1,1,D) bcast
    lens = len_ref[...]                                             # (B, 1) int32
    t_ids = jax.lax.broadcasted_iota(jnp.int32, (B, T), 1)
    mask = (t_ids < lens).astype(jnp.float32)                       # (B, T)
    pooled = jnp.sum(y * mask[:, :, None], axis=1)                  # (B, D)
    denom = jnp.maximum(jnp.sum(mask, axis=1, keepdims=True), 1.0)  # (B, 1)
    y = pooled / denom            # exact reciprocal for the pooling denominator

    # TODO(synk): Conv2dPooling is undefined in the reference source; identity.

    # ---- 2) EncoderLayer: pre-LN multi-head self-attention + linear FFN ----
    N = B
    h = _ln(y, ln1g_ref[...], ln1b_ref[...], eps)
    hb = h.astype(jnp.bfloat16)
    # single fused QKV matmul; attention scale pre-folded into the wq block.
    qkv = jnp.dot(hb, wqkv_ref[...],
                  preferred_element_type=jnp.float32) + bqkv_ref[...]   # (N, 3D)
    qkv_b = qkv.astype(jnp.bfloat16)                                    # cast once

    def heads(a):                                   # (N, D) -> (H, N, dh), once
        return jnp.transpose(a.reshape(N, H, dh), (1, 0, 2))

    q = heads(qkv_b[:, :D])
    k = heads(qkv_b[:, D:2 * D])
    v = heads(qkv_b[:, 2 * D:])

    s = jnp.einsum('hnd,hmd->hnm', q, k,
                   preferred_element_type=jnp.float32)              # (H, N, N)
    s = s - jnp.max(s, axis=-1, keepdims=True)
    p = jnp.exp(s)
    p = p * pl.reciprocal(jnp.sum(p, axis=-1, keepdims=True), approx=True)
    oh = jnp.einsum('hnm,hmd->hnd', p.astype(jnp.bfloat16), v,
                    preferred_element_type=jnp.float32)             # (H, N, dh)
    cat = jnp.transpose(oh, (1, 0, 2)).reshape(N, D)                # concat heads
    attn = jnp.dot(cat.astype(jnp.bfloat16), wo_ref[...],
                   preferred_element_type=jnp.float32) + bo_ref[...]
    y = y + attn                                    # attention dropout: identity (eval)

    h2 = _ln(y, ln2g_ref[...], ln2b_ref[...], eps)
    f = jnp.dot(h2.astype(jnp.bfloat16), wf_ref[...],
                preferred_element_type=jnp.float32) + bf_ref[...]
    y = y + jnp.maximum(f, 0.0)                     # ffn dropout: identity (eval)

    # ---- 3) tail: encoder final LN + embed LN + output Linear ----
    # TODO(synk): interleave(x, x, 2) / repeat(x, 'd -> b n d') are undefined and
    # shape-inconsistent in the reference; interpreted as cat([x, x], -1), which
    # is pre-folded into a single (D, D) weight on the host.
    y = _ln(y, fing_ref[...], finb_ref[...], eps)
    y = _ln(y, embg_ref[...], embb_ref[...], eps)
    out = jnp.dot(y.astype(jnp.bfloat16), wout_ref[...],
                  preferred_element_type=jnp.float32) + bout_ref[...]
    o_ref[...] = out.astype(o_ref.dtype)


# ----------------------------------------------------------------------------
# Full forward pass (one pallas_call)
# ----------------------------------------------------------------------------
def transformer_forward(params, padded_input, input_lengths, *, n_head, eps=1e-6):
    B, T, D = padded_input.shape

    # self.dropout(padded_input) with p=embed_dropout=0.0 -> identity.
    # The reference transposes to (T, B, D) first; LN is over D and the pool
    # reduces over T, so we operate directly on (B, T, D) and skip the transpose.
    lens = input_lengths.astype(jnp.int32).reshape(B, 1)

    args = (padded_input, lens,
            params["input_ln_g"], params["input_ln_b"],
            params["wqkv"], params["bqkv"], params["wo"], params["bo"],
            params["ln1_g"], params["ln1_b"], params["ln2_g"], params["ln2_b"],
            params["wf"], params["bf"],
            params["final_ln_g"], params["final_ln_b"],
            params["embed_ln_g"], params["embed_ln_b"],
            params["out_w_folded"], params["out_b"])

    nbytes = sum(int(a.size) * a.dtype.itemsize for a in args) + B * D * 4
    # explicit scoped-VMEM limit (v7x has only 64 MiB physical / 32 MiB default)
    vmem_limit = int(min(max(int(2.5 * nbytes), 32 << 20), 96 << 20))

    # TODO(synk): for realistic D this single gridless kernel should be split:
    # a gridded LN+pool (large batch tiles, "parallel"), and a gridded encoder
    # layer (rows "parallel" across TensorCores, weight-K tiles "arbitrary"
    # with a VMEM accumulator, 256-aligned tiles on v6e/v7x).
    return pl.pallas_call(
        functools.partial(fused_transformer_kernel, n_head=n_head, eps=eps),
        out_shape=jax.ShapeDtypeStruct((B, D), padded_input.dtype),
        in_specs=_vmem_specs(len(args)),
        out_specs=pl.BlockSpec(memory_space=VMEM),
        compiler_params=pltpu.CompilerParams(vmem_limit_bytes=vmem_limit),
    )(*args)


# ----------------------------------------------------------------------------
# Deterministic parameter init (synthetic weights) + one-time host preparation
# (QKV fuse, scale fold, concat-weight fold, bf16 cast, row-vector biases).
# ----------------------------------------------------------------------------
def init_params(key, D):
    ks = jax.random.split(key, 6)

    def w(k, fan_in, fan_out):
        return jax.random.normal(k, (fan_in, fan_out), jnp.float32) / math.sqrt(fan_in)

    one = jnp.ones((D,), jnp.float32)
    zero = jnp.zeros((D,), jnp.float32)
    return {
        "input_ln_g": one, "input_ln_b": zero,
        "final_ln_g": one, "final_ln_b": zero,
        "embed_ln_g": one, "embed_ln_b": zero,
        "wq": w(ks[0], D, D), "wk": w(ks[1], D, D),
        "wv": w(ks[2], D, D), "wo": w(ks[3], D, D),
        "bq": zero, "bk": zero, "bv": zero, "bo": zero,
        "ln1_g": one, "ln1_b": zero,
        "ln2_g": one, "ln2_b": zero,
        "wf": w(ks[4], D, D), "bf": zero,
        "out_w": w(ks[5], 2 * D, D), "out_b": zero,   # Linear(2*n_feat, n_feat)
    }


def prepare_params(p, *, n_head):
    D = p["wq"].shape[0]
    dh = D // n_head
    scale = 1.0 / math.sqrt(dh)
    row = lambda v: v.reshape(1, -1).astype(jnp.float32)
    bf = lambda w: w.astype(jnp.bfloat16)
    return {
        "input_ln_g": p["input_ln_g"].reshape(1, 1, D).astype(jnp.float32),
        "input_ln_b": p["input_ln_b"].reshape(1, 1, D).astype(jnp.float32),
        # fused QKV weight/bias; attention scale folded into the wq block.
        "wqkv": bf(jnp.concatenate([p["wq"] * scale, p["wk"], p["wv"]], axis=1)),
        "bqkv": row(jnp.concatenate([p["bq"] * scale, p["bk"], p["bv"]], axis=0)),
        "wo": bf(p["wo"]), "bo": row(p["bo"]),
        "ln1_g": row(p["ln1_g"]), "ln1_b": row(p["ln1_b"]),
        "ln2_g": row(p["ln2_g"]), "ln2_b": row(p["ln2_b"]),
        "wf": bf(p["wf"]), "bf": row(p["bf"]),
        "final_ln_g": row(p["final_ln_g"]), "final_ln_b": row(p["final_ln_b"]),
        "embed_ln_g": row(p["embed_ln_g"]), "embed_ln_b": row(p["embed_ln_b"]),
        # cat([x, x], -1) @ out_w == x @ (out_w[:D] + out_w[D:]) -- fold once.
        "out_w_folded": bf(p["out_w"][:D, :] + p["out_w"][D:, :]),
        "out_b": row(p["out_b"]),
    }


if __name__ == "__main__":
    # lane-dense demo shapes: D multiple of 128, output last dim = 128
    B, T, D, H = 8, 16, 128, 4            # batch, time, n_feat, n_head

    key = jax.random.PRNGKey(0)
    k_in, k_par = jax.random.split(key)
    padded_input = jax.random.normal(k_in, (B, T, D), jnp.float32)
    input_lengths = jnp.array([16, 12, 16, 8, 16, 10, 16, 14], dtype=jnp.int32)

    params = prepare_params(init_params(k_par, D), n_head=H)   # fold + bf16 cast once

    fwd = jax.jit(functools.partial(transformer_forward, n_head=H))
    out = fwd(params, padded_input, input_lengths)
    jax.block_until_ready(out)
    assert out.shape == (B, D) and out.dtype == jnp.float32
    print("KERNEL_OK")
</pallas_src>

<mosaic_0001>
module attributes {stable_mosaic.version = 11 : i64} {
  func.func @fused_transformer_kernel(%arg0: memref<8x16x128xf32, #tpu.memory_space<vmem>>, %arg1: memref<8x1xi32, #tpu.memory_space<vmem>>, %arg2: memref<1x1x128xf32, #tpu.memory_space<vmem>>, %arg3: memref<1x1x128xf32, #tpu.memory_space<vmem>>, %arg4: memref<128x384xbf16, #tpu.memory_space<vmem>>, %arg5: memref<1x384xf32, #tpu.memory_space<vmem>>, %arg6: memref<128x128xbf16, #tpu.memory_space<vmem>>, %arg7: memref<1x128xf32, #tpu.memory_space<vmem>>, %arg8: memref<1x128xf32, #tpu.memory_space<vmem>>, %arg9: memref<1x128xf32, #tpu.memory_space<vmem>>, %arg10: memref<1x128xf32, #tpu.memory_space<vmem>>, %arg11: memref<1x128xf32, #tpu.memory_space<vmem>>, %arg12: memref<128x128xbf16, #tpu.memory_space<vmem>>, %arg13: memref<1x128xf32, #tpu.memory_space<vmem>>, %arg14: memref<1x128xf32, #tpu.memory_space<vmem>>, %arg15: memref<1x128xf32, #tpu.memory_space<vmem>>, %arg16: memref<1x128xf32, #tpu.memory_space<vmem>>, %arg17: memref<1x128xf32, #tpu.memory_space<vmem>>, %arg18: memref<128x128xbf16, #tpu.memory_space<vmem>>, %arg19: memref<1x128xf32, #tpu.memory_space<vmem>>, %arg20: memref<8x128xf32, #tpu.memory_space<vmem>>) attributes {dimension_semantics = [], scalar_prefetch = 0 : i64, scratch_operands = 0 : i64, tpu.core_type = #tpu.core_type<tc>} {
    %c0 = arith.constant 0 : index
    %c0_0 = arith.constant 0 : index
    %c0_1 = arith.constant 0 : index
    %0 = vector.load %arg0[%c0, %c0_0, %c0_1] : memref<8x16x128xf32, #tpu.memory_space<vmem>>, vector<8x16x128xf32>
    %c0_2 = arith.constant 0 : index
    %c0_3 = arith.constant 0 : index
    %c0_4 = arith.constant 0 : index
    %1 = vector.load %arg2[%c0_2, %c0_3, %c0_4] : memref<1x1x128xf32, #tpu.memory_space<vmem>>, vector<1x1x128xf32>
    %c0_5 = arith.constant 0 : index
    %c0_6 = arith.constant 0 : index
    %c0_7 = arith.constant 0 : index
    %2 = vector.load %arg3[%c0_5, %c0_6, %c0_7] : memref<1x1x128xf32, #tpu.memory_space<vmem>>, vector<1x1x128xf32>
    %cst = arith.constant dense<0.000000e+00> : vector<8x16xf32>
    %3 = vector.multi_reduction <add>, %0, %cst [2] : vector<8x16x128xf32> to vector<8x16xf32>
    %4 = vector.shape_cast %3 : vector<8x16xf32> to vector<8x16x1xf32>
    %cst_8 = arith.constant 1.280000e+02 : f32
    %5 = vector.broadcast %cst_8 : f32 to vector<8x16x1xf32>
    %6 = arith.divf %4, %5 : vector<8x16x1xf32>
    %7 = vector.broadcast %6 : vector<8x16x1xf32> to vector<8x16x128xf32>
    %8 = arith.subf %0, %7 : vector<8x16x128xf32>
    %9 = arith.mulf %8, %8 : vector<8x16x128xf32>
    %cst_9 = arith.constant dense<0.000000e+00> : vector<8x16xf32>
    %10 = vector.multi_reduction <add>, %9, %cst_9 [2] : vector<8x16x128xf32> to vector<8x16xf32>
    %11 = vector.shape_cast %10 : vector<8x16xf32> to vector<8x16x1xf32>
    %cst_10 = arith.constant 1.280000e+02 : f32
    %12 = vector.broadcast %cst_10 : f32 to vector<8x16x1xf32>
    %13 = arith.divf %11, %12 : vector<8x16x1xf32>
    %14 = vector.broadcast %6 : vector<8x16x1xf32> to vector<8x16x128xf32>
    %15 = arith.subf %0, %14 : vector<8x16x128xf32>
    %cst_11 = arith.constant 9.99999997E-7 : f32
    %16 = vector.broadcast %cst_11 : f32 to vector<8x16x1xf32>
    %17 = arith.addf %13, %16 : vector<8x16x1xf32>
    %18 = math.rsqrt %17 : vector<8x16x1xf32>
    %19 = vector.broadcast %18 : vector<8x16x1xf32> to vector<8x16x128xf32>
    %20 = arith.mulf %15, %19 : vector<8x16x128xf32>
    %21 = vector.broadcast %1 : vector<1x1x128xf32> to vector<8x16x128xf32>
    %22 = arith.mulf %20, %21 : vector<8x16x128xf32>
    %23 = vector.broadcast %2 : vector<1x1x128xf32> to vector<8x16x128xf32>
    %24 = arith.addf %22, %23 : vector<8x16x128xf32>
    %c0_12 = arith.constant 0 : index
    %c0_13 = arith.constant 0 : index
    %25 = vector.load %arg1[%c0_12, %c0_13] : memref<8x1xi32, #tpu.memory_space<vmem>>, vector<8x1xi32>
    %26 = tpu.iota {dimensions = array<i32: 1>} : vector<8x16xi32>
    %27 = vector.broadcast %25 : vector<8x1xi32> to vector<8x16xi32>
    %28 = arith.cmpi slt, %26, %27 : vector<8x16xi32>
    %29 = arith.extui %28 : vector<8x16xi1> to vector<8x16xi32>
    %30 = arith.sitofp %29 : vector<8x16xi32> to vector<8x16xf32>
    %31 = vector.shape_cast %30 : vector<8x16xf32> to vector<8x16x1xf32>
    %32 = vector.broadcast %31 : vector<8x16x1xf32> to vector<8x16x128xf32>
    %33 = arith.mulf %24, %32 : vector<8x16x128xf32>
    %cst_14 = arith.constant dense<0.000000e+00> : vector<8x128xf32>
    %34 = vector.multi_reduction <add>, %33, %cst_14 [1] : vector<8x16x128xf32> to vector<8x128xf32>
    %cst_15 = arith.constant dense<0.000000e+00> : vector<8xf32>
    %35 = vector.multi_reduction <add>, %30, %cst_15 [1] : vector<8x16xf32> to vector<8xf32>
    %36 = vector.shape_cast %35 : vector<8xf32> to vector<8x1xf32>
    %cst_16 = arith.constant 1.000000e+00 : f32
    %37 = vector.broadcast %cst_16 : f32 to vector<8x1xf32>
    %38 = arith.maximumf %36, %37 : vector<8x1xf32>
    %39 = vector.broadcast %38 : vector<8x1xf32> to vector<8x128xf32>
    %40 = arith.divf %34, %39 : vector<8x128xf32>
    %c0_17 = arith.constant 0 : index
    %c0_18 = arith.constant 0 : index
    %41 = vector.load %arg8[%c0_17, %c0_18] : memref<1x128xf32, #tpu.memory_space<vmem>>, vector<1x128xf32>
    %c0_19 = arith.constant 0 : index
    %c0_20 = arith.constant 0 : index
    %42 = vector.load %arg9[%c0_19, %c0_20] : memref<1x128xf32, #tpu.memory_space<vmem>>, vector<1x128xf32>
    %cst_21 = arith.constant dense<0.000000e+00> : vector<8xf32>
    %43 = vector.multi_reduction <add>, %40, %cst_21 [1] : vector<8x128xf32> to vector<8xf32>
    %44 = vector.shape_cast %43 : vector<8xf32> to vector<8x1xf32>
    %cst_22 = arith.constant 1.280000e+02 : f32
    %45 = vector.broadcast %cst_22 : f32 to vector<8x1xf32>
    %46 = arith.divf %44, %45 : vector<8x1xf32>
    %47 = vector.broadcast %46 : vector<8x1xf32> to vector<8x128xf32>
    %48 = arith.subf %40, %47 : vector<8x128xf32>
    %49 = arith.mulf %48, %48 : vector<8x128xf32>
    %cst_23 = arith.constant dense<0.000000e+00> : vector<8xf32>
    %50 = vector.multi_reduction <add>, %49, %cst_23 [1] : vector<8x128xf32> to vector<8xf32>
    %51 = vector.shape_cast %50 : vector<8xf32> to vector<8x1xf32>
    %cst_24 = arith.constant 1.280000e+02 : f32
    %52 = vector.broadcast %cst_24 : f32 to vector<8x1xf32>
    %53 = arith.divf %51, %52 : vector<8x1xf32>
    %54 = vector.broadcast %46 : vector<8x1xf32> to vector<8x128xf32>
    %55 = arith.subf %40, %54 : vector<8x128xf32>
    %cst_25 = arith.constant 9.99999997E-7 : f32
    %56 = vector.broadcast %cst_25 : f32 to vector<8x1xf32>
    %57 = arith.addf %53, %56 : vector<8x1xf32>
    %58 = math.rsqrt %57 : vector<8x1xf32>
    %59 = vector.broadcast %58 : vector<8x1xf32> to vector<8x128xf32>
    %60 = arith.mulf %55, %59 : vector<8x128xf32>
    %61 = vector.broadcast %41 : vector<1x128xf32> to vector<8x128xf32>
    %62 = arith.mulf %60, %61 : vector<8x128xf32>
    %63 = vector.broadcast %42 : vector<1x128xf32> to vector<8x128xf32>
    %64 = arith.addf %62, %63 : vector<8x128xf32>
    %65 = arith.truncf %64 : vector<8x128xf32> to vector<8x128xbf16>
    %c0_26 = arith.constant 0 : index
    %c0_27 = arith.constant 0 : index
    %66 = vector.load %arg4[%c0_26, %c0_27] : memref<128x384xbf16, #tpu.memory_space<vmem>>, vector<128x384xbf16>
    %cst_28 = arith.constant dense<0.000000e+00> : vector<8x384xf32>
    %67 = tpu.matmul %65, %66, %cst_28 {dimension_numbers = #tpu.dot_dimension_numbers<[1], [0], [0], [1], [0, 0, 1, 1], [], []>} : vector<8x128xbf16>, vector<128x384xbf16>, vector<8x384xf32> -> vector<8x384xf32>
    %c0_29 = arith.constant 0 : index
    %c0_30 = arith.constant 0 : index
    %68 = vector.load %arg5[%c0_29, %c0_30] : memref<1x384xf32, #tpu.memory_space<vmem>>, vector<1x384xf32>
    %69 = vector.broadcast %68 : vector<1x384xf32> to vector<8x384xf32>
    %70 = arith.addf %67, %69 : vector<8x384xf32>
    %71 = arith.truncf %70 : vector<8x384xf32> to vector<8x384xbf16>
    %72 = vector.extract_strided_slice %71 {offsets = [0, 0], sizes = [8, 128], strides = [1, 1]} : vector<8x384xbf16> to vector<8x128xbf16>
    %73 = vector.shape_cast %72 : vector<8x128xbf16> to vector<8x4x32xbf16>
    %74 = tpu.transpose %73, [1, 0, 2] : vector<8x4x32xbf16> -> vector<4x8x32xbf16>
    %75 = vector.extract_strided_slice %71 {offsets = [0, 128], sizes = [8, 128], strides = [1, 1]} : vector<8x384xbf16> to vector<8x128xbf16>
    %76 = vector.shape_cast %75 : vector<8x128xbf16> to vector<8x4x32xbf16>
    %77 = tpu.transpose %76, [1, 0, 2] : vector<8x4x32xbf16> -> vector<4x8x32xbf16>
    %78 = vector.extract_strided_slice %71 {offsets = [0, 256], sizes = [8, 128], strides = [1, 1]} : vector<8x384xbf16> to vector<8x128xbf16>
    %79 = vector.shape_cast %78 : vector<8x128xbf16> to vector<8x4x32xbf16>
    %80 = tpu.transpose %79, [1, 0, 2] : vector<8x4x32xbf16> -> vector<4x8x32xbf16>
    "tpu.trace_start"() <{level = 10 : i32, message = "hnd,hmd->hnm"}> : () -> ()
    %cst_31 = arith.constant dense<0.000000e+00> : vector<4x8x8xf32>
    %81 = tpu.matmul %74, %77, %cst_31 {dimension_numbers = #tpu.dot_dimension_numbers<[2], [2], [1], [1], [0, 0, 0, 1, 1, 1], [0], [0]>} : vector<4x8x32xbf16>, vector<4x8x32xbf16>, vector<4x8x8xf32> -> vector<4x8x8xf32>
    "tpu.trace_stop"() : () -> ()
    %cst_32 = arith.constant dense<0xFF800000> : vector<4x8xf32>
    %82 = vector.multi_reduction <maximumf>, %81, %cst_32 [2] : vector<4x8x8xf32> to vector<4x8xf32>
    %83 = vector.shape_cast %82 : vector<4x8xf32> to vector<4x8x1xf32>
    %84 = vector.broadcast %83 : vector<4x8x1xf32> to vector<4x8x8xf32>
    %85 = arith.subf %81, %84 : vector<4x8x8xf32>
    %86 = math.exp %85 : vector<4x8x8xf32>
    %cst_33 = arith.constant dense<0.000000e+00> : vector<4x8xf32>
    %87 = vector.multi_reduction <add>, %86, %cst_33 [2] : vector<4x8x8xf32> to vector<4x8xf32>
    %88 = vector.shape_cast %87 : vector<4x8xf32> to vector<4x8x1xf32>
    %89 = tpu.reciprocal %88 {approx = true} : vector<4x8x1xf32> -> vector<4x8x1xf32>
    %90 = vector.broadcast %89 : vector<4x8x1xf32> to vector<4x8x8xf32>
    %91 = arith.mulf %86, %90 : vector<4x8x8xf32>
    %92 = arith.truncf %91 : vector<4x8x8xf32> to vector<4x8x8xbf16>
    "tpu.trace_start"() <{level = 10 : i32, message = "hnm,hmd->hnd"}> : () -> ()
    %cst_34 = arith.constant dense<0.000000e+00> : vector<4x8x32xf32>
    %93 = tpu.matmul %92, %80, %cst_34 {dimension_numbers = #tpu.dot_dimension_numbers<[2], [1], [1], [2], [0, 0, 0, 1, 1, 2], [0], [0]>} : vector<4x8x8xbf16>, vector<4x8x32xbf16>, vector<4x8x32xf32> -> vector<4x8x32xf32>
    "tpu.trace_stop"() : () -> ()
    %94 = tpu.transpose %93, [1, 0, 2] : vector<4x8x32xf32> -> vector<8x4x32xf32>
    %95 = vector.shape_cast %94 : vector<8x4x32xf32> to vector<8x128xf32>
    %96 = arith.truncf %95 : vector<8x128xf32> to vector<8x128xbf16>
    %c0_35 = arith.constant 0 : index
    %c0_36 = arith.constant 0 : index
    %97 = vector.load %arg6[%c0_35, %c0_36] : memref<128x128xbf16, #tpu.memory_space<vmem>>, vector<128x128xbf16>
    %cst_37 = arith.constant dense<0.000000e+00> : vector<8x128xf32>
    %98 = tpu.matmul %96, %97, %cst_37 {dimension_numbers = #tpu.dot_dimension_numbers<[1], [0], [0], [1], [0, 0, 1, 1], [], []>} : vector<8x128xbf16>, vector<128x128xbf16>, vector<8x128xf32> -> vector<8x128xf32>
    %c0_38 = arith.constant 0 : index
    %c0_39 = arith.constant 0 : index
    %99 = vector.load %arg7[%c0_38, %c0_39] : memref<1x128xf32, #tpu.memory_space<vmem>>, vector<1x128xf32>
    %100 = vector.broadcast %99 : vector<1x128xf32> to vector<8x128xf32>
    %101 = arith.addf %98, %100 : vector<8x128xf32>
    %102 = arith.addf %40, %101 : vector<8x128xf32>
    %c0_40 = arith.constant 0 : index
    %c0_41 = arith.constant 0 : index
    %103 = vector.load %arg10[%c0_40, %c0_41] : memref<1x128xf32, #tpu.memory_space<vmem>>, vector<1x128xf32>
    %c0_42 = arith.constant 0 : index
    %c0_43 = arith.constant 0 : index
    %104 = vector.load %arg11[%c0_42, %c0_43] : memref<1x128xf32, #tpu.memory_space<vmem>>, vector<1x128xf32>
    %cst_44 = arith.constant dense<0.000000e+00> : vector<8xf32>
    %105 = vector.multi_reduction <add>, %102, %cst_44 [1] : vector<8x128xf32> to vector<8xf32>
    %106 = vector.shape_cast %105 : vector<8xf32> to vector<8x1xf32>
    %cst_45 = arith.constant 1.280000e+02 : f32
    %107 = vector.broadcast %cst_45 : f32 to vector<8x1xf32>
    %108 = arith.divf %106, %107 : vector<8x1xf32>
    %109 = vector.broadcast %108 : vector<8x1xf32> to vector<8x128xf32>
    %110 = arith.subf %102, %109 : vector<8x128xf32>
    %111 = arith.mulf %110, %110 : vector<8x128xf32>
    %cst_46 = arith.constant dense<0.000000e+00> : vector<8xf32>
    %112 = vector.multi_reduction <add>, %111, %cst_46 [1] : vector<8x128xf32> to vector<8xf32>
    %113 = vector.shape_cast %112 : vector<8xf32> to vector<8x1xf32>
    %cst_47 = arith.constant 1.280000e+02 : f32
    %114 = vector.broadcast %cst_47 : f32 to vector<8x1xf32>
    %115 = arith.divf %113, %114 : vector<8x1xf32>
    %116 = vector.broadcast %108 : vector<8x1xf32> to vector<8x128xf32>
    %117 = arith.subf %102, %116 : vector<8x128xf32>
    %cst_48 = arith.constant 9.99999997E-7 : f32
    %118 = vector.broadcast %cst_48 : f32 to vector<8x1xf32>
    %119 = arith.addf %115, %118 : vector<8x1xf32>
    %120 = math.rsqrt %119 : vector<8x1xf32>
    %121 = vector.broadcast %120 : vector<8x1xf32> to vector<8x128xf32>
    %122 = arith.mulf %117, %121 : vector<8x128xf32>
    %123 = vector.broadcast %103 : vector<1x128xf32> to vector<8x128xf32>
    %124 = arith.mulf %122, %123 : vector<8x128xf32>
    %125 = vector.broadcast %104 : vector<1x128xf32> to vector<8x128xf32>
    %126 = arith.addf %124, %125 : vector<8x128xf32>
    %127 = arith.truncf %126 : vector<8x128xf32> to vector<8x128xbf16>
    %c0_49 = arith.constant 0 : index
    %c0_50 = arith.constant 0 : index
    %128 = vector.load %arg12[%c0_49, %c0_50] : memref<128x128xbf16, #tpu.memory_space<vmem>>, vector<128x128xbf16>
    %cst_51 = arith.constant dense<0.000000e+00> : vector<8x128xf32>
    %129 = tpu.matmul %127, %128, %cst_51 {dimension_numbers = #tpu.dot_dimension_numbers<[1], [0], [0], [1], [0, 0, 1, 1], [], []>} : vector<8x128xbf16>, vector<128x128xbf16>, vector<8x128xf32> -> vector<8x128xf32>
    %c0_52 = arith.constant 0 : index
    %c0_53 = arith.constant 0 : index
    %130 = vector.load %arg13[%c0_52, %c0_53] : memref<1x128xf32, #tpu.memory_space<vmem>>, vector<1x128xf32>
    %131 = vector.broadcast %130 : vector<1x128xf32> to vector<8x128xf32>
    %132 = arith.addf %129, %131 : vector<8x128xf32>
    %cst_54 = arith.constant 0.000000e+00 : f32
    %133 = vector.broadcast %cst_54 : f32 to vector<8x128xf32>
    %134 = arith.maximumf %132, %133 : vector<8x128xf32>
    %135 = arith.addf %102, %134 : vector<8x128xf32>
    %c0_55 = arith.constant 0 : index
    %c0_56 = arith.constant 0 : index
    %136 = vector.load %arg14[%c0_55, %c0_56] : memref<1x128xf32, #tpu.memory_space<vmem>>, vector<1x128xf32>
    %c0_57 = arith.constant 0 : index
    %c0_58 = arith.constant 0 : index
    %137 = vector.load %arg15[%c0_57, %c0_58] : memref<1x128xf32, #tpu.memory_space<vmem>>, vector<1x128xf32>
    %cst_59 = arith.constant dense<0.000000e+00> : vector<8xf32>
    %138 = vector.multi_reduction <add>, %135, %cst_59 [1] : vector<8x128xf32> to vector<8xf32>
    %139 = vector.shape_cast %138 : vector<8xf32> to vector<8x1xf32>
    %cst_60 = arith.constant 1.280000e+02 : f32
    %140 = vector.broadcast %cst_60 : f32 to vector<8x1xf32>
    %141 = arith.divf %139, %140 : vector<8x1xf32>
    %142 = vector.broadcast %141 : vector<8x1xf32> to vector<8x128xf32>
    %143 = arith.subf %135, %142 : vector<8x128xf32>
    %144 = arith.mulf %143, %143 : vector<8x128xf32>
    %cst_61 = arith.constant dense<0.000000e+00> : vector<8xf32>
    %145 = vector.multi_reduction <add>, %144, %cst_61 [1] : vector<8x128xf32> to vector<8xf32>
    %146 = vector.shape_cast %145 : vector<8xf32> to vector<8x1xf32>
    %cst_62 = arith.constant 1.280000e+02 : f32
    %147 = vector.broadcast %cst_62 : f32 to vector<8x1xf32>
    %148 = arith.divf %146, %147 : vector<8x1xf32>
    %149 = vector.broadcast %141 : vector<8x1xf32> to vector<8x128xf32>
    %150 = arith.subf %135, %149 : vector<8x128xf32>
    %cst_63 = arith.constant 9.99999997E-7 : f32
    %151 = vector.broadcast %cst_63 : f32 to vector<8x1xf32>
    %152 = arith.addf %148, %151 : vector<8x1xf32>
    %153 = math.rsqrt %152 : vector<8x1xf32>
    %154 = vector.broadcast %153 : vector<8x1xf32> to vector<8x128xf32>
    %155 = arith.mulf %150, %154 : vector<8x128xf32>
    %156 = vector.broadcast %136 : vector<1x128xf32> to vector<8x128xf32>
    %157 = arith.mulf %155, %156 : vector<8x128xf32>
    %158 = vector.broadcast %137 : vector<1x128xf32> to vector<8x128xf32>
    %159 = arith.addf %157, %158 : vector<8x128xf32>
    %c0_64 = arith.constant 0 : index
    %c0_65 = arith.constant 0 : index
    %160 = vector.load %arg16[%c0_64, %c0_65] : memref<1x128xf32, #tpu.memory_space<vmem>>, vector<1x128xf32>
    %c0_66 = arith.constant 0 : index
    %c0_67 = arith.constant 0 : index
    %161 = vector.load %arg17[%c0_66, %c0_67] : memref<1x128xf32, #tpu.memory_space<vmem>>, vector<1x128xf32>
    %cst_68 = arith.constant dense<0.000000e+00> : vector<8xf32>
    %162 = vector.multi_reduction <add>, %159, %cst_68 [1] : vector<8x128xf32> to vector<8xf32>
    %163 = vector.shape_cast %162 : vector<8xf32> to vector<8x1xf32>
    %cst_69 = arith.constant 1.280000e+02 : f32
    %164 = vector.broadcast %cst_69 : f32 to vector<8x1xf32>
    %165 = arith.divf %163, %164 : vector<8x1xf32>
    %166 = vector.broadcast %165 : vector<8x1xf32> to vector<8x128xf32>
    %167 = arith.subf %159, %166 : vector<8x128xf32>
    %168 = arith.mulf %167, %167 : vector<8x128xf32>
    %cst_70 = arith.constant dense<0.000000e+00> : vector<8xf32>
    %169 = vector.multi_reduction <add>, %168, %cst_70 [1] : vector<8x128xf32> to vector<8xf32>
    %170 = vector.shape_cast %169 : vector<8xf32> to vector<8x1xf32>
    %cst_71 = arith.constant 1.280000e+02 : f32
    %171 = vector.broadcast %cst_71 : f32 to vector<8x1xf32>
    %172 = arith.divf %170, %171 : vector<8x1xf32>
    %173 = vector.broadcast %165 : vector<8x1xf32> to vector<8x128xf32>
    %174 = arith.subf %159, %173 : vector<8x128xf32>
    %cst_72 = arith.constant 9.99999997E-7 : f32
    %175 = vector.broadcast %cst_72 : f32 to vector<8x1xf32>
    %176 = arith.addf %172, %175 : vector<8x1xf32>
    %177 = math.rsqrt %176 : vector<8x1xf32>
    %178 = vector.broadcast %177 : vector<8x1xf32> to vector<8x128xf32>
    %179 = arith.mulf %174, %178 : vector<8x128xf32>
    %180 = vector.broadcast %160 : vector<1x128xf32> to vector<8x128xf32>
    %181 = arith.mulf %179, %180 : vector<8x128xf32>
    %182 = vector.broadcast %161 : vector<1x128xf32> to vector<8x128xf32>
    %183 = arith.addf %181, %182 : vector<8x128xf32>
    %184 = arith.truncf %183 : vector<8x128xf32> to vector<8x128xbf16>
    %c0_73 = arith.constant 0 : index
    %c0_74 = arith.constant 0 : index
    %185 = vector.load %arg18[%c0_73, %c0_74] : memref<128x128xbf16, #tpu.memory_space<vmem>>, vector<128x128xbf16>
    %cst_75 = arith.constant dense<0.000000e+00> : vector<8x128xf32>
    %186 = tpu.matmul %184, %185, %cst_75 {dimension_numbers = #tpu.dot_dimension_numbers<[1], [0], [0], [1], [0, 0, 1, 1], [], []>} : vector<8x128xbf16>, vector<128x128xbf16>, vector<8x128xf32> -> vector<8x128xf32>
    %c0_76 = arith.constant 0 : index
    %c0_77 = arith.constant 0 : index
    %187 = vector.load %arg19[%c0_76, %c0_77] : memref<1x128xf32, #tpu.memory_space<vmem>>, vector<1x128xf32>
    %188 = vector.broadcast %187 : vector<1x128xf32> to vector<8x128xf32>
    %189 = arith.addf %186, %188 : vector<8x128xf32>
    %c0_78 = arith.constant 0 : index
    %c0_79 = arith.constant 0 : index
    %190 = vector.load %arg20[%c0_78, %c0_79] : memref<8x128xf32, #tpu.memory_space<vmem>>, vector<8x128xf32>
    tpu.vector_store %arg20[%c0_78, %c0_79], %189 {strides = array<i32>} : memref<8x128xf32, #tpu.memory_space<vmem>>, vector<8x128xf32>,
    return
  }
}

</mosaic_0001>

<llo_original>
// kernel: transformer_forward.1
$region0: #{transformer_forward.1}
  #allocation0 [shape = 'u32[]', space=smem, size = 0x4, offset = 0x4, fixed_abs, tag = 'smem constant byte address 0x4 - core index']
  #allocation1 [shape = 'u32[144,128]{1,0:T(1,128)}', space=vmem, size = 0x12000, scoped, tag = 'internal scratch']
  %s0 = inlined_call_operand.hbm [shape: f32[8,16,128], index: 0, kind: input, shape index: {}]
  %s1 = inlined_call_operand.vmem [shape: s32[8,1], index: 1, kind: input, shape index: {}]
  %s2 = inlined_call_operand.vmem [shape: f32[1,1,128], index: 2, kind: input, shape index: {}]
  %s3 = inlined_call_operand.vmem [shape: f32[1,1,128], index: 3, kind: input, shape index: {}]
  %s4 = inlined_call_operand.hbm [shape: bf16[128,384], index: 4, kind: input, shape index: {}]
  %s5 = inlined_call_operand.vmem [shape: f32[1,384], index: 5, kind: input, shape index: {}]
  %s6 = inlined_call_operand.vmem [shape: bf16[128,128], index: 6, kind: input, shape index: {}]
  %s7 = inlined_call_operand.vmem [shape: f32[1,128], index: 7, kind: input, shape index: {}]
  %s8 = inlined_call_operand.vmem [shape: f32[1,128], index: 8, kind: input, shape index: {}]
  %s9 = inlined_call_operand.vmem [shape: f32[1,128], index: 9, kind: input, shape index: {}]
  %s10 = inlined_call_operand.vmem [shape: f32[1,128], index: 10, kind: input, shape index: {}]
  %s11 = inlined_call_operand.hbm [shape: f32[1,128], index: 11, kind: input, shape index: {}]
  %s12 = inlined_call_operand.hbm [shape: bf16[128,128], index: 12, kind: input, shape index: {}]
  %s13 = inlined_call_operand.hbm [shape: f32[1,128], index: 13, kind: input, shape index: {}]
  %s14 = inlined_call_operand.hbm [shape: f32[1,128], index: 14, kind: input, shape index: {}]
  %s15 = inlined_call_operand.hbm [shape: f32[1,128], index: 15, kind: input, shape index: {}]
  %s16 = inlined_call_operand.hbm [shape: f32[1,128], index: 16, kind: input, shape index: {}]
  %s17 = inlined_call_operand.hbm [shape: f32[1,128], index: 17, kind: input, shape index: {}]
  %s18 = inlined_call_operand.hbm [shape: bf16[128,128], index: 18, kind: input, shape index: {}]
  %s19 = inlined_call_operand.hbm [shape: f32[1,128], index: 19, kind: input, shape index: {}]
  %s20 = inlined_call_operand.hbm [shape: f32[8,128], index: 20, kind: output, shape index: {}]
  %s21 = sld [smem:[#allocation0]]
  $region134: #{transformer_forward.1} parent=0
    _
  %s23 = ssub.s32 1, %s21
  %s24 = scalar_select 0, %s23, %s21
  $region1: #{transformer_forward.1} parent=0
    #allocation2 [shape = 'u8[65536]{0}', space=vmem, size = 0x10000, scoped, tag = 'input window, operand 0, single buffered']
    #allocation3 [shape = 's32[1]{0}', space=sflag, size = 0x4, scoped, tag = 'scoped memory for transformer_forward.1']
    #allocation4 [shape = 's32[1]{0}', space=sflag, size = 0x4, scoped, tag = 'scoped memory for transformer_forward.1']
    #allocation5 [shape = 'u8[98304]{0}', space=vmem, size = 0x18000, scoped, tag = 'input window, operand 4, single buffered']
    #allocation6 [shape = 's32[1]{0}', space=sflag, size = 0x4, scoped, tag = 'scoped memory for transformer_forward.1']
    #allocation7 [shape = 'u8[512]{0}', space=vmem, size = 0x400, scoped, tag = 'input window, operand 11, single buffered']
    #allocation8 [shape = 'u8[32768]{0}', space=vmem, size = 0x8000, scoped, tag = 'input window, operand 12, single buffered']
    #allocation9 [shape = 's32[1]{0}', space=sflag, size = 0x4, scoped, tag = 'scoped memory for transformer_forward.1']
    #allocation10 [shape = 'u8[512]{0}', space=vmem, size = 0x400, scoped, tag = 'input window, operand 13, single buffered']
    #allocation11 [shape = 'u8[512]{0}', space=vmem, size = 0x400, scoped, tag = 'input window, operand 14, single buffered']
    #allocation12 [shape = 's32[1]{0}', space=sflag, size = 0x4, scoped, tag = 'scoped memory for transformer_forward.1']
    #allocation13 [shape = 'u8[512]{0}', space=vmem, size = 0x400, scoped, tag = 'input window, operand 15, single buffered']
    #allocation14 [shape = 'u8[512]{0}', space=vmem, size = 0x400, scoped, tag = 'input window, operand 16, single buffered']
    #allocation15 [shape = 's32[1]{0}', space=sflag, size = 0x4, scoped, tag = 'scoped memory for transformer_forward.1']
    #allocation16 [shape = 'u8[512]{0}', space=vmem, size = 0x400, scoped, tag = 'input window, operand 17, single buffered']
    #allocation17 [shape = 'u8[32768]{0}', space=vmem, size = 0x8000, scoped, tag = 'input window, operand 18, single buffered']
    #allocation18 [shape = 's32[1]{0}', space=sflag, size = 0x4, scoped, tag = 'scoped memory for transformer_forward.1']
    #allocation19 [shape = 'u8[512]{0}', space=vmem, size = 0x400, scoped, tag = 'input window, operand 19, single buffered']
    #allocation20 [shape = 'u8[4096]{0}', space=vmem, size = 0x1000, scoped, tag = 'output window, operand 0, single buffered']
    %25 = vsyncpa [#allocation3], 0
    %26 = vsyncpa [#allocation6], 0
    %27 = vsyncpa [#allocation9], 0
    %28 = vsyncpa [#allocation12], 0
    %29 = vsyncpa [#allocation15], 0
    %30 = vsyncpa [#allocation18], 0
    %31 = vsyncpa [#allocation4], 0
    // Predicated region
    $region2: #{transformer_forward.1} parent=1 // pred_check
      _
    $region3: #{transformer_forward.1} parent=1 // pred_check_branch
      %33 = sbr.rel (0) target = $region5
    $region4: #{transformer_forward.1} parent=1 // pred_region
      %s35 = ssub.s32 2048, 2048
      %36 = vsyncadd [#allocation3], %s35
      %s37 = sshll.u32 [#allocation2], 4
      %s38 = int_to_ptr.vmem [resolvable:$true] %s37
      %43 = dma.hbm_to_vmem [thread:$0]  %s0, 2048, %s38, [#allocation3], 128, 128, 8
    $region5: #{transformer_forward.1} parent=1 // pred_fallthru
      _
    // Predicated region
    $region6: #{transformer_forward.1} parent=1 // pred_check
      _
    $region7: #{transformer_forward.1} parent=1 // pred_check_branch
      %45 = sbr.rel (0) target = $region9
    $region8: #{transformer_forward.1} parent=1 // pred_region
      _
    $region9: #{transformer_forward.1} parent=1 // pred_fallthru
      _
    // Predicated region
    $region10: #{transformer_forward.1} parent=1 // pred_check
      _
    $region11: #{transformer_forward.1} parent=1 // pred_check_branch
      %47 = sbr.rel (0) target = $region13
    $region12: #{transformer_forward.1} parent=1 // pred_region
      _
    $region13: #{transformer_forward.1} parent=1 // pred_fallthru
      _
    // Predicated region
    $region14: #{transformer_forward.1} parent=1 // pred_check
      _
    $region15: #{transformer_forward.1} parent=1 // pred_check_branch
      %49 = sbr.rel (0) target = $region17
    $region16: #{transformer_forward.1} parent=1 // pred_region
      _
    $region17: #{transformer_forward.1} parent=1 // pred_fallthru
      _
    // Predicated region
    $region18: #{transformer_forward.1} parent=1 // pred_check
      _
    $region19: #{transformer_forward.1} parent=1 // pred_check_branch
      %51 = sbr.rel (0) target = $region21
    $region20: #{transformer_forward.1} parent=1 // pred_region
      %s53 = ssub.s32 3072, 3072
      %54 = vsyncadd [#allocation6], %s53
      %s55 = sshll.u32 [#allocation5], 4
      %s56 = int_to_ptr.vmem [resolvable:$true] %s55
      %61 = dma.hbm_to_vmem [thread:$0]  %s4, 3072, %s56, [#allocation6], 192, 192, 12
    $region21: #{transformer_forward.1} parent=1 // pred_fallthru
      _
    // Predicated region
    $region22: #{transformer_forward.1} parent=1 // pred_check
      _
    $region23: #{transformer_forward.1} parent=1 // pred_check_branch
      %63 = sbr.rel (0) target = $region25
    $region24: #{transformer_forward.1} parent=1 // pred_region
      _
    $region25: #{transformer_forward.1} parent=1 // pred_fallthru
      _
    // Predicated region
    $region26: #{transformer_forward.1} parent=1 // pred_check
      _
    $region27: #{transformer_forward.1} parent=1 // pred_check_branch
      %65 = sbr.rel (0) target = $region29
    $region28: #{transformer_forward.1} parent=1 // pred_region
      _
    $region29: #{transformer_forward.1} parent=1 // pred_fallthru
      _
    // Predicated region
    $region30: #{transformer_forward.1} parent=1 // pred_check
      _
    $region31: #{transformer_forward.1} parent=1 // pred_check_branch
      %67 = sbr.rel (0) target = $region33
    $region32: #{transformer_forward.1} parent=1 // pred_region
      _
    $region33: #{transformer_forward.1} parent=1 // pred_fallthru
      _
    // Predicated region
    $region34: #{transformer_forward.1} parent=1 // pred_check
      _
    $region35: #{transformer_forward.1} parent=1 // pred_check_branch
      %69 = sbr.rel (0) target = $region37
    $region36: #{transformer_forward.1} parent=1 // pred_region
      _
    $region37: #{transformer_forward.1} parent=1 // pred_fallthru
      _
    // Predicated region
    $region38: #{transformer_forward.1} parent=1 // pred_check
      _
    $region39: #{transformer_forward.1} parent=1 // pred_check_branch
      %71 = sbr.rel (0) target = $region41
    $region40: #{transformer_forward.1} parent=1 // pred_region
      _
    $region41: #{transformer_forward.1} parent=1 // pred_fallthru
      _
    // Predicated region
    $region42: #{transformer_forward.1} parent=1 // pred_check
      _
    $region43: #{transformer_forward.1} parent=1 // pred_check_branch
      %73 = sbr.rel (0) target = $region45
    $region44: #{transformer_forward.1} parent=1 // pred_region
      _
    $region45: #{transformer_forward.1} parent=1 // pred_fallthru
      _
    // Predicated region
    $region46: #{transformer_forward.1} parent=1 // pred_check
      _
    $region47: #{transformer_forward.1} parent=1 // pred_check_branch
      %75 = sbr.rel (0) target = $region49
    $region48: #{transformer_forward.1} parent=1 // pred_region
      %s77 = ssub.s32 16, 16
      %78 = vsyncadd [#allocation6], %s77
      %s80 = sshll.u32 [#allocation7], 4
      %s81 = int_to_ptr.vmem [resolvable:$true] %s80
      %83 = dma.hbm_to_vmem [thread:$0]  %s11, 16, %s81, [#allocation6]
    $region49: #{transformer_forward.1} parent=1 // pred_fallthru
      _
    // Predicated region
    $region50: #{transformer_forward.1} parent=1 // pred_check
      _
    $region51: #{transformer_forward.1} parent=1 // pred_check_branch
      %85 = sbr.rel (0) target = $region53
    $region52: #{transformer_forward.1} parent=1 // pred_region
      %s87 = ssub.s32 1024, 1024
      %88 = vsyncadd [#allocation9], %s87
      %s89 = sshll.u32 [#allocation8], 4
      %s90 = int_to_ptr.vmem [resolvable:$true] %s89
      %95 = dma.hbm_to_vmem [thread:$0]  %s12, 1024, %s90, [#allocation9], 64, 64, 4
    $region53: #{transformer_forward.1} parent=1 // pred_fallthru
      _
    // Predicated region
    $region54: #{transformer_forward.1} parent=1 // pred_check
      _
    $region55: #{transformer_forward.1} parent=1 // pred_check_branch
      %97 = sbr.rel (0) target = $region57
    $region56: #{transformer_forward.1} parent=1 // pred_region
      %s99 = ssub.s32 16, 16
      %100 = vsyncadd [#allocation9], %s99
      %s102 = sshll.u32 [#allocation10], 4
      %s103 = int_to_ptr.vmem [resolvable:$true] %s102
      %105 = dma.hbm_to_vmem [thread:$0]  %s13, 16, %s103, [#allocation9]
    $region57: #{transformer_forward.1} parent=1 // pred_fallthru
      _
    // Predicated region
    $region58: #{transformer_forward.1} parent=1 // pred_check
      _
    $region59: #{transformer_forward.1} parent=1 // pred_check_branch
      %107 = sbr.rel (0) target = $region61
    $region60: #{transformer_forward.1} parent=1 // pred_region
      %s109 = ssub.s32 16, 16
      %110 = vsyncadd [#allocation12], %s109
      %s112 = sshll.u32 [#allocation11], 4
      %s113 = int_to_ptr.vmem [resolvable:$true] %s112
      %115 = dma.hbm_to_vmem [thread:$0]  %s14, 16, %s113, [#allocation12]
    $region61: #{transformer_forward.1} parent=1 // pred_fallthru
      _
    // Predicated region
    $region62: #{transformer_forward.1} parent=1 // pred_check
      _
    $region63: #{transformer_forward.1} parent=1 // pred_check_branch
      %117 = sbr.rel (0) target = $region65
    $region64: #{transformer_forward.1} parent=1 // pred_region
      %s119 = ssub.s32 16, 16
      %120 = vsyncadd [#allocation12], %s119
      %s122 = sshll.u32 [#allocation13], 4
      %s123 = int_to_ptr.vmem [resolvable:$true] %s122
      %125 = dma.hbm_to_vmem [thread:$0]  %s15, 16, %s123, [#allocation12]
    $region65: #{transformer_forward.1} parent=1 // pred_fallthru
      _
    // Predicated region
    $region66: #{transformer_forward.1} parent=1 // pred_check
      _
    $region67: #{transformer_forward.1} parent=1 // pred_check_branch
      %127 = sbr.rel (0) target = $region69
    $region68: #{transformer_forward.1} parent=1 // pred_region
      %s129 = ssub.s32 16, 16
      %130 = vsyncadd [#allocation15], %s129
      %s132 = sshll.u32 [#allocation14], 4
      %s133 = int_to_ptr.vmem [resolvable:$true] %s132
      %135 = dma.hbm_to_vmem [thread:$0]  %s16, 16, %s133, [#allocation15]
    $region69: #{transformer_forward.1} parent=1 // pred_fallthru
      _
    // Predicated region
    $region70: #{transformer_forward.1} parent=1 // pred_check
      _
    $region71: #{transformer_forward.1} parent=1 // pred_check_branch
      %137 = sbr.rel (0) target = $region73
    $region72: #{transformer_forward.1} parent=1 // pred_region
      %s139 = ssub.s32 16, 16
      %140 = vsyncadd [#allocation15], %s139
      %s142 = sshll.u32 [#allocation16], 4
      %s143 = int_to_ptr.vmem [resolvable:$true] %s142
      %145 = dma.hbm_to_vmem [thread:$0]  %s17, 16, %s143, [#allocation15]
    $region73: #{transformer_forward.1} parent=1 // pred_fallthru
      _
    // Predicated region
    $region74: #{transformer_forward.1} parent=1 // pred_check
      _
    $region75: #{transformer_forward.1} parent=1 // pred_check_branch
      %147 = sbr.rel (0) target = $region77
    $region76: #{transformer_forward.1} parent=1 // pred_region
      %s149 = ssub.s32 1024, 1024
      %150 = vsyncadd [#allocation18], %s149
      %s151 = sshll.u32 [#allocation17], 4
      %s152 = int_to_ptr.vmem [resolvable:$true] %s151
      %157 = dma.hbm_to_vmem [thread:$0]  %s18, 1024, %s152, [#allocation18], 64, 64, 4
    $region77: #{transformer_forward.1} parent=1 // pred_fallthru
      _
    // Predicated region
    $region78: #{transformer_forward.1} parent=1 // pred_check
      _
    $region79: #{transformer_forward.1} parent=1 // pred_check_branch
      %159 = sbr.rel (0) target = $region81
    $region80: #{transformer_forward.1} parent=1 // pred_region
      %s161 = ssub.s32 16, 16
      %162 = vsyncadd [#allocation18], %s161
      %s164 = sshll.u32 [#allocation19], 4
      %s165 = int_to_ptr.vmem [resolvable:$true] %s164
      %167 = dma.hbm_to_vmem [thread:$0]  %s19, 16, %s165, [#allocation18]
    $region81: #{transformer_forward.1} parent=1 // pred_fallthru
      _
    // Predicated region
    $region82: #{transformer_forward.1} parent=1 // pred_check
      _
    $region83: #{transformer_forward.1} parent=1 // pred_check_branch
      %169 = sbr.rel (0) target = $region85
    $region84: #{transformer_forward.1} parent=1 // pred_region
      %170 = dma.done [#allocation3], 2048
    $region85: #{transformer_forward.1} parent=1 // pred_fallthru
      _
    // Predicated region
    $region86: #{transformer_forward.1} parent=1 // pred_check
      _
    $region87: #{transformer_forward.1} parent=1 // pred_check_branch
      %172 = sbr.rel (0) target = $region89
    $region88: #{transformer_forward.1} parent=1 // pred_region
      %173 = dma.done [#allocation6], 3072
    $region89: #{transformer_forward.1} parent=1 // pred_fallthru
      _
    // Predicated region
    $region90: #{transformer_forward.1} parent=1 // pred_check
      _
    $region91: #{transformer_forward.1} parent=1 // pred_check_branch
      %175 = sbr.rel (0) target = $region93
    $region92: #{transformer_forward.1} parent=1 // pred_region
      %176 = dma.done [#allocation6], 16
    $region93: #{transformer_forward.1} parent=1 // pred_fallthru
      _
    // Predicated region
    $region94: #{transformer_forward.1} parent=1 // pred_check
      _
    $region95: #{transformer_forward.1} parent=1 // pred_check_branch
      %178 = sbr.rel (0) target = $region97
    $region96: #{transformer_forward.1} parent=1 // pred_region
      %179 = dma.done [#allocation9], 1024
    $region97: #{transformer_forward.1} parent=1 // pred_fallthru
      _
    // Predicated region
    $region98: #{transformer_forward.1} parent=1 // pred_check
      _
    $region99: #{transformer_forward.1} parent=1 // pred_check_branch
      %181 = sbr.rel (0) target = $region101
    $region100: #{transformer_forward.1} parent=1 // pred_region
      %182 = dma.done [#allocation9], 16
    $region101: #{transformer_forward.1} parent=1 // pred_fallthru
      _
    // Predicated region
    $region102: #{transformer_forward.1} parent=1 // pred_check
      _
    $region103: #{transformer_forward.1} parent=1 // pred_check_branch
      %184 = sbr.rel (0) target = $region105
    $region104: #{transformer_forward.1} parent=1 // pred_region
      %185 = dma.done [#allocation12], 16
    $region105: #{transformer_forward.1} parent=1 // pred_fallthru
      _
    // Predicated region
    $region106: #{transformer_forward.1} parent=1 // pred_check
      _
    $region107: #{transformer_forward.1} parent=1 // pred_check_branch
      %187 = sbr.rel (0) target = $region109
    $region108: #{transformer_forward.1} parent=1 // pred_region
      %188 = dma.done [#allocation12], 16
    $region109: #{transformer_forward.1} parent=1 // pred_fallthru
      _
    // Predicated region
    $region110: #{transformer_forward.1} parent=1 // pred_check
      _
    $region111: #{transformer_forward.1} parent=1 // pred_check_branch
      %190 = sbr.rel (0) target = $region113
    $region112: #{transformer_forward.1} parent=1 // pred_region
      %191 = dma.done [#allocation15], 16
    $region113: #{transformer_forward.1} parent=1 // pred_fallthru
      _
    // Predicated region
    $region114: #{transformer_forward.1} parent=1 // pred_check
      _
    $region115: #{transformer_forward.1} parent=1 // pred_check_branch
      %193 = sbr.rel (0) target = $region117
    $region116: #{transformer_forward.1} parent=1 // pred_region
      %194 = dma.done [#allocation15], 16
    $region117: #{transformer_forward.1} parent=1 // pred_fallthru
      _
    // Predicated region
    $region118: #{transformer_forward.1} parent=1 // pred_check
      _
    $region119: #{transformer_forward.1} parent=1 // pred_check_branch
      %196 = sbr.rel (0) target = $region121
    $region120: #{transformer_forward.1} parent=1 // pred_region
      %197 = dma.done [#allocation18], 1024
    $region121: #{transformer_forward.1} parent=1 // pred_fallthru
      _
    // Predicated region
    $region122: #{transformer_forward.1} parent=1 // pred_check
      _
    $region123: #{transformer_forward.1} parent=1 // pred_check_branch
      %199 = sbr.rel (0) target = $region125
    $region124: #{transformer_forward.1} parent=1 // pred_region
      %200 = dma.done [#allocation18], 16
    $region125: #{transformer_forward.1} parent=1 // pred_fallthru
      _
    %v202 = vld [vmem:[#allocation2] sm:$0xff]
    %v203 = vld [vmem:[#allocation2 + $0x8] sm:$0xff]
    %v204 = vld [vmem:[#allocation2 + $0x10] sm:$0xff]
    %v205 = vld [vmem:[#allocation2 + $0x18] sm:$0xff]
    %v206 = vld [vmem:[#allocation2 + $0x20] sm:$0xff]
    %v207 = vld [vmem:[#allocation2 + $0x28] sm:$0xff]
    %v208 = vld [vmem:[#allocation2 + $0x30] sm:$0xff]
    %v209 = vld [vmem:[#allocation2 + $0x38] sm:$0xff]
    %v210 = vld [vmem:[#allocation2 + $0x40] sm:$0xff]
    %v211 = vld [vmem:[#allocation2 + $0x48] sm:$0xff]
    %v212 = vld [vmem:[#allocation2 + $0x50] sm:$0xff]
    %v213 = vld [vmem:[#allocation2 + $0x58] sm:$0xff]
    %v214 = vld [vmem:[#allocation2 + $0x60] sm:$0xff]
    %v215 = vld [vmem:[#allocation2 + $0x68] sm:$0xff]
    %v216 = vld [vmem:[#allocation2 + $0x70] sm:$0xff]
    %v217 = vld [vmem:[#allocation2 + $0x78] sm:$0xff]
    %v218 = vld [vmem:[%s2] sm:$0x1]
    %v219 = vld [vmem:[%s3] sm:$0x1]
    %220 = vadd.xlane.f32.xlu0 %v202
    %v221 = vpop.xlane.xlu0 %220
    %222 = vadd.xlane.f32.xlu0 %v203
    %v223 = vpop.xlane.xlu0 %222
    %224 = vadd.xlane.f32.xlu0 %v204
    %v225 = vpop.xlane.xlu0 %224
    %226 = vadd.xlane.f32.xlu0 %v205
    %v227 = vpop.xlane.xlu0 %226
    %228 = vadd.xlane.f32.xlu0 %v206
    %v229 = vpop.xlane.xlu0 %228
    %230 = vadd.xlane.f32.xlu0 %v207
    %v231 = vpop.xlane.xlu0 %230
    %232 = vadd.xlane.f32.xlu0 %v208
    %v233 = vpop.xlane.xlu0 %232
    %234 = vadd.xlane.f32.xlu0 %v209
    %v235 = vpop.xlane.xlu0 %234
    %236 = vadd.xlane.f32.xlu0 %v210
    %v237 = vpop.xlane.xlu0 %236
    %238 = vadd.xlane.f32.xlu0 %v211
    %v239 = vpop.xlane.xlu0 %238
    %240 = vadd.xlane.f32.xlu0 %v212
    %v241 = vpop.xlane.xlu0 %240
    %242 = vadd.xlane.f32.xlu0 %v213
    %v243 = vpop.xlane.xlu0 %242
    %244 = vadd.xlane.f32.xlu0 %v214
    %v245 = vpop.xlane.xlu0 %244
    %246 = vadd.xlane.f32.xlu0 %v215
    %v247 = vpop.xlane.xlu0 %246
    %248 = vadd.xlane.f32.xlu0 %v216
    %v249 = vpop.xlane.xlu0 %248
    %250 = vadd.xlane.f32.xlu0 %v217
    %v251 = vpop.xlane.xlu0 %250
    %v252 = vrcp.pop 128.0
    %v253 = vmul.f32 %v221, %v252
    %v254 = vmul.f32 %v223, %v252
    %v255 = vmul.f32 %v225, %v252
    %v256 = vmul.f32 %v227, %v252
    %v257 = vmul.f32 %v229, %v252
    %v258 = vmul.f32 %v231, %v252
    %v259 = vmul.f32 %v233, %v252
    %v260 = vmul.f32 %v235, %v252
    %v261 = vmul.f32 %v237, %v252
    %v262 = vmul.f32 %v239, %v252
    %v263 = vmul.f32 %v241, %v252
    %v264 = vmul.f32 %v243, %v252
    %v265 = vmul.f32 %v245, %v252
    %v266 = vmul.f32 %v247, %v252
    %v267 = vmul.f32 %v249, %v252
    %v268 = vmul.f32 %v251, %v252
    %v269 = vsub.f32 %v202, %v253
    %v270 = vsub.f32 %v203, %v254
    %v271 = vsub.f32 %v204, %v255
    %v272 = vsub.f32 %v205, %v256
    %v273 = vsub.f32 %v206, %v257
    %v274 = vsub.f32 %v207, %v258
    %v275 = vsub.f32 %v208, %v259
    %v276 = vsub.f32 %v209, %v260
    %v277 = vsub.f32 %v210, %v261
    %v278 = vsub.f32 %v211, %v262
    %v279 = vsub.f32 %v212, %v263
    %v280 = vsub.f32 %v213, %v264
    %v281 = vsub.f32 %v214, %v265
    %v282 = vsub.f32 %v215, %v266
    %v283 = vsub.f32 %v216, %v267
    %v284 = vsub.f32 %v217, %v268
    %v285 = vmul.f32 %v269, %v269
    %v286 = vmul.f32 %v270, %v270
    %v287 = vmul.f32 %v271, %v271
    %v288 = vmul.f32 %v272, %v272
    %v289 = vmul.f32 %v273, %v273
    %v290 = vmul.f32 %v274, %v274
    %v291 = vmul.f32 %v275, %v275
    %v292 = vmul.f32 %v276, %v276
    %v293 = vmul.f32 %v277, %v277
    %v294 = vmul.f32 %v278, %v278
    %v295 = vmul.f32 %v279, %v279
    %v296 = vmul.f32 %v280, %v280
    %v297 = vmul.f32 %v281, %v281
    %v298 = vmul.f32 %v282, %v282
    %v299 = vmul.f32 %v283, %v283
    %v300 = vmul.f32 %v284, %v284
    %301 = vadd.xlane.f32.xlu0 %v285
    %v302 = vpop.xlane.xlu0 %301
    %303 = vadd.xlane.f32.xlu0 %v286
    %v304 = vpop.xlane.xlu0 %303
    %305 = vadd.xlane.f32.xlu0 %v287
    %v306 = vpop.xlane.xlu0 %305
    %307 = vadd.xlane.f32.xlu0 %v288
    %v308 = vpop.xlane.xlu0 %307
    %309 = vadd.xlane.f32.xlu0 %v289
    %v310 = vpop.xlane.xlu0 %309
    %311 = vadd.xlane.f32.xlu0 %v290
    %v312 = vpop.xlane.xlu0 %311
    %313 = vadd.xlane.f32.xlu0 %v291
    %v314 = vpop.xlane.xlu0 %313
    %315 = vadd.xlane.f32.xlu0 %v292
    %v316 = vpop.xlane.xlu0 %315
    %317 = vadd.xlane.f32.xlu0 %v293
    %v318 = vpop.xlane.xlu0 %317
    %319 = vadd.xlane.f32.xlu0 %v294
    %v320 = vpop.xlane.xlu0 %319
    %321 = vadd.xlane.f32.xlu0 %v295
    %v322 = vpop.xlane.xlu0 %321
    %323 = vadd.xlane.f32.xlu0 %v296
    %v324 = vpop.xlane.xlu0 %323
    %325 = vadd.xlane.f32.xlu0 %v297
    %v326 = vpop.xlane.xlu0 %325
    %327 = vadd.xlane.f32.xlu0 %v298
    %v328 = vpop.xlane.xlu0 %327
    %329 = vadd.xlane.f32.xlu0 %v299
    %v330 = vpop.xlane.xlu0 %329
    %331 = vadd.xlane.f32.xlu0 %v300
    %v332 = vpop.xlane.xlu0 %331
    %v333 = vmul.f32 %v302, %v252
    %v334 = vmul.f32 %v304, %v252
    %v335 = vmul.f32 %v306, %v252
    %v336 = vmul.f32 %v308, %v252
    %v337 = vmul.f32 %v310, %v252
    %v338 = vmul.f32 %v312, %v252
    %v339 = vmul.f32 %v314, %v252
    %v340 = vmul.f32 %v316, %v252
    %v341 = vmul.f32 %v318, %v252
    %v342 = vmul.f32 %v320, %v252
    %v343 = vmul.f32 %v322, %v252
    %v344 = vmul.f32 %v324, %v252
    %v345 = vmul.f32 %v326, %v252
    %v346 = vmul.f32 %v328, %v252
    %v347 = vmul.f32 %v330, %v252
    %v348 = vmul.f32 %v332, %v252
    %v349 = vadd.f32 %v333, 1e-06
    %v350 = vadd.f32 %v334, 1e-06
    %v351 = vadd.f32 %v335, 1e-06
    %v352 = vadd.f32 %v336, 1e-06
    %v353 = vadd.f32 %v337, 1e-06
    %v354 = vadd.f32 %v338, 1e-06
    %v355 = vadd.f32 %v339, 1e-06
    %v356 = vadd.f32 %v340, 1e-06
    %v357 = vadd.f32 %v341, 1e-06
    %v358 = vadd.f32 %v342, 1e-06
    %v359 = vadd.f32 %v343, 1e-06
    %v360 = vadd.f32 %v344, 1e-06
    %v361 = vadd.f32 %v345, 1e-06
    %v362 = vadd.f32 %v346, 1e-06
    %v363 = vadd.f32 %v347, 1e-06
    %v364 = vadd.f32 %v348, 1e-06
    %v365 = vrsqrt.pop %v349
    %v366 = vrsqrt.pop %v350
    %v367 = vrsqrt.pop %v351
    %v368 = vrsqrt.pop %v352
    %v369 = vrsqrt.pop %v353
    %v370 = vrsqrt.pop %v354
    %v371 = vrsqrt.pop %v355
    %v372 = vrsqrt.pop %v356
    %v373 = vrsqrt.pop %v357
    %v374 = vrsqrt.pop %v358
    %v375 = vrsqrt.pop %v359
    %v376 = vrsqrt.pop %v360
    %v377 = vrsqrt.pop %v361
    %v378 = vrsqrt.pop %v362
    %v379 = vrsqrt.pop %v363
    %v380 = vrsqrt.pop %v364
    %v381 = vmul.f32 %v269, %v365
    %v382 = vmul.f32 %v270, %v366
    %v383 = vmul.f32 %v271, %v367
    %v384 = vmul.f32 %v272, %v368
    %v385 = vmul.f32 %v273, %v369
    %v386 = vmul.f32 %v274, %v370
    %v387 = vmul.f32 %v275, %v371
    %v388 = vmul.f32 %v276, %v372
    %v389 = vmul.f32 %v277, %v373
    %v390 = vmul.f32 %v278, %v374
    %v391 = vmul.f32 %v279, %v375
    %v392 = vmul.f32 %v280, %v376
    %v393 = vmul.f32 %v281, %v377
    %v394 = vmul.f32 %v282, %v378
    %v395 = vmul.f32 %v283, %v379
    %v396 = vmul.f32 %v284, %v380
    %v398 = vlaneseq
    %v399 = vshrl.u32 %v398, 7
    %v400 = vsub.s32 0, %v399
    %v401 = vrot.slane %v218, %v400
    %v403 = vmul.f32 %v381, %v401
    %v404 = vmul.f32 %v382, %v401
    %v405 = vmul.f32 %v383, %v401
    %v406 = vmul.f32 %v384, %v401
    %v407 = vmul.f32 %v385, %v401
    %v408 = vmul.f32 %v386, %v401
    %v409 = vmul.f32 %v387, %v401
    %v410 = vmul.f32 %v388, %v401
    %v411 = vmul.f32 %v389, %v401
    %v412 = vmul.f32 %v390, %v401
    %v413 = vmul.f32 %v391, %v401
    %v414 = vmul.f32 %v392, %v401
    %v415 = vmul.f32 %v393, %v401
    %v416 = vmul.f32 %v394, %v401
    %v417 = vmul.f32 %v395, %v401
    %v418 = vmul.f32 %v396, %v401
    %v420 = vlaneseq
    %v421 = vshrl.u32 %v420, 7
    %v422 = vsub.s32 0, %v421
    %v423 = vrot.slane %v219, %v422
    %v425 = vadd.f32 %v403, %v423
    %v426 = vadd.f32 %v404, %v423
    %v427 = vadd.f32 %v405, %v423
    %v428 = vadd.f32 %v406, %v423
    %v429 = vadd.f32 %v407, %v423
    %v430 = vadd.f32 %v408, %v423
    %v431 = vadd.f32 %v409, %v423
    %v432 = vadd.f32 %v410, %v423
    %v433 = vadd.f32 %v411, %v423
    %v434 = vadd.f32 %v412, %v423
    %v435 = vadd.f32 %v413, %v423
    %v436 = vadd.f32 %v414, %v423
    %v437 = vadd.f32 %v415, %v423
    %v438 = vadd.f32 %v416, %v423
    %v439 = vadd.f32 %v417, %v423
    %v440 = vadd.f32 %v418, %v423
    %v441 = vld [vmem:[%s1] sm:$0xff]
    %v442 = vlaneseq
    %v443 = vand.u32 %v442, 127
    %444 = vset.pattern.permute.xlu0 0
    %445 = vperm.xlu0 %444, %v441
    %v446 = vpop.permute.xlu0 %445
    %vm447 = vcmp.lt.s32.totalorder %v443, %v446
    %v448 = vsel %vm447, 1, 0
    %v449 = vcvt.s32.f32 %v448
    %v450 = vlaneseq
    %v451 = vshrl.u32 %v450, 7
    %v452 = vsub.s32 0, %v451
    %v453 = vrot.slane %v449, %v452
    %455 = vbcast.lane.b32.xlu0 %v453, 256
    %v456 = vpop.permute.xlu0 %455
    %s458 = sor.u32 256, 8
    %459 = vbcast.lane.b32.xlu0 %v453, %s458
    %v460 = vpop.permute.xlu0 %459
    %v461 = vlaneseq
    %v462 = vshrl.u32 %v461, 7
    %v463 = vsub.s32 1, %v462
    %v464 = vrot.slane %v449, %v463
    %466 = vbcast.lane.b32.xlu0 %v464, 256
    %v467 = vpop.permute.xlu0 %466
    %s469 = sor.u32 256, 8
    %470 = vbcast.lane.b32.xlu0 %v464, %s469
    %v471 = vpop.permute.xlu0 %470
    %v472 = vlaneseq
    %v473 = vshrl.u32 %v472, 7
    %v474 = vsub.s32 2, %v473
    %v475 = vrot.slane %v449, %v474
    %477 = vbcast.lane.b32.xlu0 %v475, 256
    %v478 = vpop.permute.xlu0 %477
    %s480 = sor.u32 256, 8
    %481 = vbcast.lane.b32.xlu0 %v475, %s480
    %v482 = vpop.permute.xlu0 %481
    %v483 = vlaneseq
    %v484 = vshrl.u32 %v483, 7
    %v485 = vsub.s32 3, %v484
    %v486 = vrot.slane %v449, %v485
    %488 = vbcast.lane.b32.xlu0 %v486, 256
    %v489 = vpop.permute.xlu0 %488
    %s491 = sor.u32 256, 8
    %492 = vbcast.lane.b32.xlu0 %v486, %s491
    %v493 = vpop.permute.xlu0 %492
    %v494 = vlaneseq
    %v495 = vshrl.u32 %v494, 7
    %v496 = vsub.s32 4, %v495
    %v497 = vrot.slane %v449, %v496
    %499 = vbcast.lane.b32.xlu0 %v497, 256
    %v500 = vpop.permute.xlu0 %499
    %s502 = sor.u32 256, 8
    %503 = vbcast.lane.b32.xlu0 %v497, %s502
    %v504 = vpop.permute.xlu0 %503
    %v505 = vlaneseq
    %v506 = vshrl.u32 %v505, 7
    %v507 = vsub.s32 5, %v506
    %v508 = vrot.slane %v449, %v507
    %510 = vbcast.lane.b32.xlu0 %v508, 256
    %v511 = vpop.permute.xlu0 %510
    %s513 = sor.u32 256, 8
    %514 = vbcast.lane.b32.xlu0 %v508, %s513
    %v515 = vpop.permute.xlu0 %514
    %v516 = vlaneseq
    %v517 = vshrl.u32 %v516, 7
    %v518 = vsub.s32 6, %v517
    %v519 = vrot.slane %v449, %v518
    %521 = vbcast.lane.b32.xlu0 %v519, 256
    %v522 = vpop.permute.xlu0 %521
    %s524 = sor.u32 256, 8
    %525 = vbcast.lane.b32.xlu0 %v519, %s524
    %v526 = vpop.permute.xlu0 %525
    %v527 = vlaneseq
    %v528 = vshrl.u32 %v527, 7
    %v529 = vsub.s32 7, %v528
    %v530 = vrot.slane %v449, %v529
    %532 = vbcast.lane.b32.xlu0 %v530, 256
    %v533 = vpop.permute.xlu0 %532
    %s535 = sor.u32 256, 8
    %536 = vbcast.lane.b32.xlu0 %v530, %s535
    %v537 = vpop.permute.xlu0 %536
    %v538 = vmul.f32 %v425, %v456
    %v539 = vmul.f32 %v426, %v460
    %v540 = vmul.f32 %v427, %v467
    %v541 = vmul.f32 %v428, %v471
    %v542 = vmul.f32 %v429, %v478
    %v543 = vmul.f32 %v430, %v482
    %v544 = vmul.f32 %v431, %v489
    %v545 = vmul.f32 %v432, %v493
    %v546 = vmul.f32 %v433, %v500
    %v547 = vmul.f32 %v434, %v504
    %v548 = vmul.f32 %v435, %v511
    %v549 = vmul.f32 %v436, %v515
    %v550 = vmul.f32 %v437, %v522
    %v551 = vmul.f32 %v438, %v526
    %v552 = vmul.f32 %v439, %v533
    %v553 = vmul.f32 %v440, %v537
    %v554 = vadd.f32 %v538, %v539
    %v555 = vrot.slane %v554, 4
    %v556 = vadd.f32 %v554, %v555
    %v557 = vrot.slane %v556, 2
    %v558 = vadd.f32 %v556, %v557
    %v559 = vrot.slane %v558, 1
    %v560 = vadd.f32 %v558, %v559
    %v561 = vadd.f32 %v540, %v541
    %v562 = vrot.slane %v561, 4
    %v563 = vadd.f32 %v561, %v562
    %v564 = vrot.slane %v563, 2
    %v565 = vadd.f32 %v563, %v564
    %v566 = vrot.slane %v565, 1
    %v567 = vadd.f32 %v565, %v566
    %v568 = vadd.f32 %v542, %v543
    %v569 = vrot.slane %v568, 4
    %v570 = vadd.f32 %v568, %v569
    %v571 = vrot.slane %v570, 2
    %v572 = vadd.f32 %v570, %v571
    %v573 = vrot.slane %v572, 1
    %v574 = vadd.f32 %v572, %v573
    %v575 = vadd.f32 %v544, %v545
    %v576 = vrot.slane %v575, 4
    %v577 = vadd.f32 %v575, %v576
    %v578 = vrot.slane %v577, 2
    %v579 = vadd.f32 %v577, %v578
    %v580 = vrot.slane %v579, 1
    %v581 = vadd.f32 %v579, %v580
    %v582 = vadd.f32 %v546, %v547
    %v583 = vrot.slane %v582, 4
    %v584 = vadd.f32 %v582, %v583
    %v585 = vrot.slane %v584, 2
    %v586 = vadd.f32 %v584, %v585
    %v587 = vrot.slane %v586, 1
    %v588 = vadd.f32 %v586, %v587
    %v589 = vadd.f32 %v548, %v549
    %v590 = vrot.slane %v589, 4
    %v591 = vadd.f32 %v589, %v590
    %v592 = vrot.slane %v591, 2
    %v593 = vadd.f32 %v591, %v592
    %v594 = vrot.slane %v593, 1
    %v595 = vadd.f32 %v593, %v594
    %v596 = vadd.f32 %v550, %v551
    %v597 = vrot.slane %v596, 4
    %v598 = vadd.f32 %v596, %v597
    %v599 = vrot.slane %v598, 2
    %v600 = vadd.f32 %v598, %v599
    %v601 = vrot.slane %v600, 1
    %v602 = vadd.f32 %v600, %v601
    %v603 = vadd.f32 %v552, %v553
    %v604 = vrot.slane %v603, 4
    %v605 = vadd.f32 %v603, %v604
    %v606 = vrot.slane %v605, 2
    %v607 = vadd.f32 %v605, %v606
    %v608 = vrot.slane %v607, 1
    %v609 = vadd.f32 %v607, %v608
    %vm610 = vcmask 130048
    %v611 = vsel %vm610, %v449, 0.0
    %612 = vadd.xlane.f32.xlu0 %v611
    %v613 = vpop.xlane.xlu0 %612
    %v614 = vmax.f32 %v613, 1.0
    %v616 = vrot.slane %v614, 1
    %v617 = vrot.slane %v614, 2
    %v618 = vrot.slane %v614, 3
    %v619 = vrot.slane %v614, 4
    %v620 = vrot.slane %v614, 5
    %v621 = vrot.slane %v614, 6
    %v622 = vrot.slane %v614, 7
    %v631 = vrcp.pop %v614
    %v632 = vmul.f32 %v560, %v631
    %v633 = vrcp.pop %v616
    %v634 = vmul.f32 %v567, %v633
    %v635 = vrcp.pop %v617
    %v636 = vmul.f32 %v574, %v635
    %v637 = vrcp.pop %v618
    %v638 = vmul.f32 %v581, %v637
    %v639 = vrcp.pop %v619
    %v640 = vmul.f32 %v588, %v639
    %v641 = vrcp.pop %v620
    %v642 = vmul.f32 %v595, %v641
    %v643 = vrcp.pop %v621
    %v644 = vmul.f32 %v602, %v643
    %v645 = vrcp.pop %v622
    %v646 = vmul.f32 %v609, %v645
    %v647 = vld [vmem:[%s8] sm:$0x1]
    %v648 = vld [vmem:[%s9] sm:$0x1]
    %v657 = vrot.slane %v634, 7
    %vm658 = vcmask 1041409
    %v659 = vsel %vm658, %v657, %v632
    %v660 = vrot.slane %v636, 6
    %vm661 = vcmask 1042434
    %v662 = vsel %vm661, %v660, %v659
    %v663 = vrot.slane %v638, 5
    %vm664 = vcmask 1043459
    %v665 = vsel %vm664, %v663, %v662
    %v666 = vrot.slane %v640, 4
    %vm667 = vcmask 1044484
    %v668 = vsel %vm667, %v666, %v665
    %v669 = vrot.slane %v642, 3
    %vm670 = vcmask 1045509
    %v671 = vsel %vm670, %v669, %v668
    %v672 = vrot.slane %v644, 2
    %vm673 = vcmask 1046534
    %v674 = vsel %vm673, %v672, %v671
    %v675 = vrot.slane %v646, 1
    %vm676 = vcmask 1047559
    %v677 = vsel %vm676, %v675, %v674
    %679 = vadd.xlane.f32.xlu0 %v677
    %v680 = vpop.xlane.xlu0 %679
    %v681 = vmul.f32 %v680, %v252
    %v683 = vrot.slane %v681, 1
    %v684 = vrot.slane %v681, 2
    %v685 = vrot.slane %v681, 3
    %v686 = vrot.slane %v681, 4
    %v687 = vrot.slane %v681, 5
    %v688 = vrot.slane %v681, 6
    %v689 = vrot.slane %v681, 7
    %v698 = vsub.f32 %v632, %v681
    %v699 = vsub.f32 %v634, %v683
    %v700 = vsub.f32 %v636, %v684
    %v701 = vsub.f32 %v638, %v685
    %v702 = vsub.f32 %v640, %v686
    %v703 = vsub.f32 %v642, %v687
    %v704 = vsub.f32 %v644, %v688
    %v705 = vsub.f32 %v646, %v689
    %v706 = vmul.f32 %v698, %v698
    %v707 = vmul.f32 %v699, %v699
    %v708 = vmul.f32 %v700, %v700
    %v709 = vmul.f32 %v701, %v701
    %v710 = vmul.f32 %v702, %v702
    %v711 = vmul.f32 %v703, %v703
    %v712 = vmul.f32 %v704, %v704
    %v713 = vmul.f32 %v705, %v705
    %v722 = vrot.slane %v707, 7
    %v723 = vsel %vm658, %v722, %v706
    %v724 = vrot.slane %v708, 6
    %v725 = vsel %vm661, %v724, %v723
    %v726 = vrot.slane %v709, 5
    %v727 = vsel %vm664, %v726, %v725
    %v728 = vrot.slane %v710, 4
    %v729 = vsel %vm667, %v728, %v727
    %v730 = vrot.slane %v711, 3
    %v731 = vsel %vm670, %v730, %v729
    %v732 = vrot.slane %v712, 2
    %v733 = vsel %vm673, %v732, %v731
    %v734 = vrot.slane %v713, 1
    %v735 = vsel %vm676, %v734, %v733
    %737 = vadd.xlane.f32.xlu0 %v735
    %v738 = vpop.xlane.xlu0 %737
    %v739 = vmul.f32 %v738, %v252
    %v740 = vadd.f32 %v739, 1e-06
    %v741 = vrsqrt.pop %v740
    %v743 = vrot.slane %v741, 1
    %v744 = vrot.slane %v741, 2
    %v745 = vrot.slane %v741, 3
    %v746 = vrot.slane %v741, 4
    %v747 = vrot.slane %v741, 5
    %v748 = vrot.slane %v741, 6
    %v749 = vrot.slane %v741, 7
    %v758 = vmul.f32 %v698, %v741
    %v759 = vmul.f32 %v699, %v743
    %v760 = vmul.f32 %v700, %v744
    %v761 = vmul.f32 %v701, %v745
    %v762 = vmul.f32 %v702, %v746
    %v763 = vmul.f32 %v703, %v747
    %v764 = vmul.f32 %v704, %v748
    %v765 = vmul.f32 %v705, %v749
    %v767 = vlaneseq
    %v768 = vshrl.u32 %v767, 7
    %v769 = vsub.s32 0, %v768
    %v770 = vrot.slane %v647, %v769
    %v772 = vmul.f32 %v758, %v770
    %v773 = vmul.f32 %v759, %v770
    %v774 = vmul.f32 %v760, %v770
    %v775 = vmul.f32 %v761, %v770
    %v776 = vmul.f32 %v762, %v770
    %v777 = vmul.f32 %v763, %v770
    %v778 = vmul.f32 %v764, %v770
    %v779 = vmul.f32 %v765, %v770
    %v781 = vlaneseq
    %v782 = vshrl.u32 %v781, 7
    %v783 = vsub.s32 0, %v782
    %v784 = vrot.slane %v648, %v783
    %v786 = vadd.f32 %v772, %v784
    %v787 = vadd.f32 %v773, %v784
    %v788 = vadd.f32 %v774, %v784
    %v789 = vadd.f32 %v775, %v784
    %v790 = vadd.f32 %v776, %v784
    %v791 = vadd.f32 %v777, %v784
    %v792 = vadd.f32 %v778, %v784
    %v793 = vadd.f32 %v779, %v784
    %v794 = vpack.c.bf16 %v786, %v786
    %v795 = vpack.c.bf16 %v787, %v787
    %v796 = vpack.c.bf16 %v788, %v788
    %v797 = vpack.c.bf16 %v789, %v789
    %v798 = vpack.c.bf16 %v790, %v790
    %v799 = vpack.c.bf16 %v791, %v791
    %v800 = vpack.c.bf16 %v792, %v792
    %v801 = vpack.c.bf16 %v793, %v793
    %v802 = vld [vmem:[#allocation5] sm:$0xff]
    %v803 = vld [vmem:[#allocation5 + $0x8] sm:$0xf]
    %v804 = vld [vmem:[#allocation5 + $0xc] sm:$0xff]
    %v805 = vld [vmem:[#allocation5 + $0x14] sm:$0xf]
    %v806 = vld [vmem:[#allocation5 + $0x18] sm:$0xff]
    %v807 = vld [vmem:[#allocation5 + $0x20] sm:$0xf]
    %v808 = vld [vmem:[#allocation5 + $0x24] sm:$0xff]
    %v809 = vld [vmem:[#allocation5 + $0x2c] sm:$0xf]
    %v810 = vld [vmem:[#allocation5 + $0x30] sm:$0xff]
    %v811 = vld [vmem:[#allocation5 + $0x38] sm:$0xf]
    %v812 = vld [vmem:[#allocation5 + $0x3c] sm:$0xff]
    %v813 = vld [vmem:[#allocation5 + $0x44] sm:$0xf]
    %v814 = vld [vmem:[#allocation5 + $0x48] sm:$0xff]
    %v815 = vld [vmem:[#allocation5 + $0x50] sm:$0xf]
    %v816 = vld [vmem:[#allocation5 + $0x54] sm:$0xff]
    %v817 = vld [vmem:[#allocation5 + $0x5c] sm:$0xf]
    %v818 = vld [vmem:[#allocation5 + $0x60] sm:$0xff]
    %v819 = vld [vmem:[#allocation5 + $0x68] sm:$0xf]
    %v820 = vld [vmem:[#allocation5 + $0x6c] sm:$0xff]
    %v821 = vld [vmem:[#allocation5 + $0x74] sm:$0xf]
    %v822 = vld [vmem:[#allocation5 + $0x78] sm:$0xff]
    %v823 = vld [vmem:[#allocation5 + $0x80] sm:$0xf]
    %v824 = vld [vmem:[#allocation5 + $0x84] sm:$0xff]
    %v825 = vld [vmem:[#allocation5 + $0x8c] sm:$0xf]
    %v826 = vld [vmem:[#allocation5 + $0x90] sm:$0xff]
    %v827 = vld [vmem:[#allocation5 + $0x98] sm:$0xf]
    %v828 = vld [vmem:[#allocation5 + $0x9c] sm:$0xff]
    %v829 = vld [vmem:[#allocation5 + $0xa4] sm:$0xf]
    %v830 = vld [vmem:[#allocation5 + $0xa8] sm:$0xff]
    %v831 = vld [vmem:[#allocation5 + $0xb0] sm:$0xf]
    %v832 = vld [vmem:[#allocation5 + $0xb4] sm:$0xff]
    %v833 = vld [vmem:[#allocation5 + $0xbc] sm:$0xf]
    %v834 = vld [vmem:[%s5] sm:$0x7]
    %v836 = vlaneseq
    %v837 = vshrl.u32 %v836, 7
    %v838 = vsub.s32 0, %v837
    %v839 = vrot.slane %v834, %v838
    %v840 = vlaneseq
    %v841 = vshrl.u32 %v840, 7
    %v842 = vsub.s32 1, %v841
    %v843 = vrot.slane %v834, %v842
    %v844 = vlaneseq
    %v845 = vshrl.u32 %v844, 7
    %v846 = vsub.s32 2, %v845
    %v847 = vrot.slane %v834, %v846
    %v859 = vunpack.c.l.b16 %v794
    %v860 = vunpack.c.l.b16 %v795
    %v861 = vunpack.c.l.b16 %v796
    %v862 = vunpack.c.l.b16 %v797
    %v863 = vunpack.c.l.b16 %v798
    %v864 = vunpack.c.l.b16 %v799
    %v865 = vunpack.c.l.b16 %v800
    %v866 = vunpack.c.l.b16 %v801
    %v867 = vrot.slane %v860, 7
    %v868 = vsel %vm658, %v867, %v859
    %v869 = vrot.slane %v861, 6
    %v870 = vsel %vm661, %v869, %v868
    %v871 = vrot.slane %v862, 5
    %v872 = vsel %vm664, %v871, %v870
    %v873 = vrot.slane %v863, 4
    %v874 = vsel %vm667, %v873, %v872
    %v875 = vrot.slane %v864, 3
    %v876 = vsel %vm670, %v875, %v874
    %v877 = vrot.slane %v865, 2
    %v878 = vsel %vm673, %v877, %v876
    %v879 = vrot.slane %v866, 1
    %v880 = vsel %vm676, %v879, %v878
    %v881 = vpack.c.b16 %v880, %v880
    %v915 = vunpack.c.l.b16 %v802
    %v916 = vunpack.c.h.b16 %v802
    %v917 = vunpack.c.l.b16 %v803
    %v918 = vunpack.c.l.b16 %v804
    %v919 = vunpack.c.h.b16 %v804
    %v920 = vunpack.c.l.b16 %v805
    %v921 = vunpack.c.l.b16 %v806
    %v922 = vunpack.c.h.b16 %v806
    %v923 = vunpack.c.l.b16 %v807
    %v924 = vunpack.c.l.b16 %v808
    %v925 = vunpack.c.h.b16 %v808
    %v926 = vunpack.c.l.b16 %v809
    %v927 = vunpack.c.l.b16 %v810
    %v928 = vunpack.c.h.b16 %v810
    %v929 = vunpack.c.l.b16 %v811
    %v930 = vunpack.c.l.b16 %v812
    %v931 = vunpack.c.h.b16 %v812
    %v932 = vunpack.c.l.b16 %v813
    %v933 = vunpack.c.l.b16 %v814
    %v934 = vunpack.c.h.b16 %v814
    %v935 = vunpack.c.l.b16 %v815
    %v936 = vunpack.c.l.b16 %v816
    %v937 = vunpack.c.h.b16 %v816
    %v938 = vunpack.c.l.b16 %v817
    %v939 = vunpack.c.l.b16 %v818
    %v940 = vunpack.c.h.b16 %v818
    %v941 = vunpack.c.l.b16 %v819
    %v942 = vunpack.c.l.b16 %v820
    %v943 = vunpack.c.h.b16 %v820
    %v944 = vunpack.c.l.b16 %v821
    %v945 = vunpack.c.l.b16 %v822
    %v946 = vunpack.c.h.b16 %v822
    %v947 = vunpack.c.l.b16 %v823
    %v948 = vunpack.c.l.b16 %v824
    %v949 = vunpack.c.h.b16 %v824
    %v950 = vunpack.c.l.b16 %v825
    %v951 = vunpack.c.l.b16 %v826
    %v952 = vunpack.c.h.b16 %v826
    %v953 = vunpack.c.l.b16 %v827
    %v954 = vunpack.c.l.b16 %v828
    %v955 = vunpack.c.h.b16 %v828
    %v956 = vunpack.c.l.b16 %v829
    %v957 = vunpack.c.l.b16 %v830
    %v958 = vunpack.c.h.b16 %v830
    %v959 = vunpack.c.l.b16 %v831
    %v960 = vunpack.c.l.b16 %v832
    %v961 = vunpack.c.h.b16 %v832
    %v962 = vunpack.c.l.b16 %v833
    %v963 = vpack.c.b16 %v918, %v915
    %v964 = vpack.c.b16 %v919, %v916
    %v965 = vpack.c.b16 %v920, %v917
    %v966 = vpack.c.b16 %v924, %v921
    %v967 = vpack.c.b16 %v925, %v922
    %v968 = vpack.c.b16 %v926, %v923
    %v969 = vpack.c.b16 %v930, %v927
    %v970 = vpack.c.b16 %v931, %v928
    %v971 = vpack.c.b16 %v932, %v929
    %v972 = vpack.c.b16 %v936, %v933
    %v973 = vpack.c.b16 %v937, %v934
    %v974 = vpack.c.b16 %v938, %v935
    %v975 = vpack.c.b16 %v942, %v939
    %v976 = vpack.c.b16 %v943, %v940
    %v977 = vpack.c.b16 %v944, %v941
    %v978 = vpack.c.b16 %v948, %v945
    %v979 = vpack.c.b16 %v949, %v946
    %v980 = vpack.c.b16 %v950, %v947
    %v981 = vpack.c.b16 %v954, %v951
    %v982 = vpack.c.b16 %v955, %v952
    %v983 = vpack.c.b16 %v956, %v953
    %v984 = vpack.c.b16 %v960, %v957
    %v985 = vpack.c.b16 %v961, %v958
    %v986 = vpack.c.b16 %v962, %v959
    %1011 = vmatprep.subr.bf16.mxu0 %v964
    %1012 = vmatpush1.bf16.msra.mxu0 %v963
    %1013 = vmatprep.subr.bf16.mxu0 %v967
    %1014 = vmatpush1.bf16.msra.mxu0 %v966
    %1015 = vmatprep.subr.bf16.mxu0 %v970
    %1016 = vmatpush1.bf16.msra.mxu0 %v969
    %1017 = vmatprep.subr.bf16.mxu0 %v973
    %1018 = vmatpush1.bf16.msra.mxu0 %v972
    %1019 = vmatprep.subr.bf16.mxu0 %v976
    %1020 = vmatpush1.bf16.msra.mxu0 %v975
    %1021 = vmatprep.subr.bf16.mxu0 %v979
    %1022 = vmatpush1.bf16.msra.mxu0 %v978
    %1023 = vmatprep.subr.bf16.mxu0 %v982
    %1024 = vmatpush1.bf16.msra.mxu0 %v981
    %1025 = vmatprep.subr.bf16.mxu0 %v985
    %1026 = vmatpush1.bf16.msra.mxu0 %v984
    %1027 = vmatprep.subr.bf16.mxu0 0
    %1028 = vmatpush1.bf16.msra.mxu0 0
    %1029 = vmatprep.subr.bf16.mxu0 0
    %1030 = vmatpush1.bf16.msra.mxu0 0
    %1031 = vmatprep.subr.bf16.mxu0 0
    %1032 = vmatpush1.bf16.msra.mxu0 0
    %1033 = vmatprep.subr.bf16.mxu0 0
    %1034 = vmatpush1.bf16.msra.mxu0 0
    %1035 = vmatprep.subr.bf16.mxu0 0
    %1036 = vmatpush1.bf16.msra.mxu0 0
    %1037 = vmatprep.subr.bf16.mxu0 0
    %1038 = vmatpush1.bf16.msra.mxu0 0
    %1039 = vmatprep.subr.bf16.mxu0 0
    %1040 = vmatpush1.bf16.msra.mxu0 0
    %1041 = vmatprep.subr.bf16.mxu0 0
    %1042 = vmatpush1.bf16.msra.mxu0 0
    %1043 = vmatprep.mubr.bf16.mxu0 0
    %1044 = vmatmul.mubr.bf16.gmra.mrb[0].mxu0 %v881
    %v1045 = vpop.f32.mrb[0].mxu0
    %v1046 = vadd.f32 %v839, %v1045
    %v1047 = vpop.f32.mrb[0].mxu0
    %v1048 = vadd.f32 %v843, %v1047
    %v1049 = vpop.f32.mrb[0].mxu0
    %v1050 = vpop.f32.mrb[0].mxu0
    %1051 = vdwg.mxu0
    %1052 = vmatprep.subr.bf16.mxu0 0
    %1053 = vmatpush1.bf16.msra.mxu0 %v965
    %1054 = vmatprep.subr.bf16.mxu0 0
    %1055 = vmatpush1.bf16.msra.mxu0 %v968
    %1056 = vmatprep.subr.bf16.mxu0 0
    %1057 = vmatpush1.bf16.msra.mxu0 %v971
    %1058 = vmatprep.subr.bf16.mxu0 0
    %1059 = vmatpush1.bf16.msra.mxu0 %v974
    %1060 = vmatprep.subr.bf16.mxu0 0
    %1061 = vmatpush1.bf16.msra.mxu0 %v977
    %1062 = vmatprep.subr.bf16.mxu0 0
    %1063 = vmatpush1.bf16.msra.mxu0 %v980
    %1064 = vmatprep.subr.bf16.mxu0 0
    %1065 = vmatpush1.bf16.msra.mxu0 %v983
    %1066 = vmatprep.subr.bf16.mxu0 0
    %1067 = vmatpush1.bf16.msra.mxu0 %v986
    %1068 = vmatprep.subr.bf16.mxu0 0
    %1069 = vmatpush1.bf16.msra.mxu0 0
    %1070 = vmatprep.subr.bf16.mxu0 0
    %1071 = vmatpush1.bf16.msra.mxu0 0
    %1072 = vmatprep.subr.bf16.mxu0 0
    %1073 = vmatpush1.bf16.msra.mxu0 0
    %1074 = vmatprep.subr.bf16.mxu0 0
    %1075 = vmatpush1.bf16.msra.mxu0 0
    %1076 = vmatprep.subr.bf16.mxu0 0
    %1077 = vmatpush1.bf16.msra.mxu0 0
    %1078 = vmatprep.subr.bf16.mxu0 0
    %1079 = vmatpush1.bf16.msra.mxu0 0
    %1080 = vmatprep.subr.bf16.mxu0 0
    %1081 = vmatpush1.bf16.msra.mxu0 0
    %1082 = vmatprep.subr.bf16.mxu0 0
    %1083 = vmatpush1.bf16.msra.mxu0 0
    %1084 = vmatprep.mubr.bf16.mxu0 0
    %1085 = vmatmul.mubr.bf16.gmra.mrb[0].mxu0 %v881
    %v1086 = vpop.f32.mrb[0].mxu0
    %v1087 = vadd.f32 %v847, %v1086
    %v1088 = vpop.f32.mrb[0].mxu0
    %v1089 = vpop.f32.mrb[0].mxu0
    %v1090 = vpop.f32.mrb[0].mxu0
    %1091 = vdwg.mxu0
    %v1092 = vpack.c.bf16 %v1046, %v1046
    %v1093 = vpack.c.bf16 %v1048, %v1048
    %v1094 = vpack.c.bf16 %v1087, %v1087
    %1096 = vrot.lane.b32.xlu0 %v1092, 96
    %v1097 = vpop.permute.xlu0 %1096
    %1098 = vrot.lane.b32.xlu0 %v1092, 64
    %v1099 = vpop.permute.xlu0 %1098
    %1100 = vrot.lane.b32.xlu0 %v1092, 32
    %v1101 = vpop.permute.xlu0 %1100
    %v1103 = vunpack.c.l.s4 1983009808
    %v1104 = vunpack.c.0.s8 %v1103
    %v1105 = vlaneseq
    %v1106 = vshrl.u32 %v1105, 7
    %v1107 = vsub.s32 %v1104, %v1106
    %v1108 = vrot.slane %v1092, %v1107
    %v1111 = vunpack.c.l.s4 1983009808
    %v1112 = vunpack.c.0.s8 %v1111
    %v1113 = vlaneseq
    %v1114 = vshrl.u32 %v1113, 7
    %v1115 = vsub.s32 %v1112, %v1114
    %v1116 = vrot.slane %v1099, %v1115
    %v1117 = vcombine.low %v1108, %v1116
    %v1118 = vcombine.high %v1108, %v1116
    %v1120 = vunpack.c.l.s4 1934713408
    %v1121 = vunpack.c.0.s8 %v1120
    %v1122 = vlaneseq
    %v1123 = vshrl.u32 %v1122, 7
    %v1124 = vsub.s32 %v1121, %v1123
    %v1125 = vrot.slane %v1117, %v1124
    %v1127 = vunpack.c.l.s4 1934713408
    %v1128 = vunpack.c.0.s8 %v1127
    %v1129 = vlaneseq
    %v1130 = vshrl.u32 %v1129, 7
    %v1131 = vsub.s32 %v1128, %v1130
    %v1132 = vrot.slane %v1118, %v1131
    %v1133 = vcombine.high %v1125, 0
    %v1134 = vcombine.high %v1132, 0
    %v1137 = vunpack.c.l.s4 1983009808
    %v1138 = vunpack.c.0.s8 %v1137
    %v1139 = vlaneseq
    %v1140 = vshrl.u32 %v1139, 7
    %v1141 = vsub.s32 %v1138, %v1140
    %v1142 = vrot.slane %v1097, %v1141
    %v1145 = vunpack.c.l.s4 1983009808
    %v1146 = vunpack.c.0.s8 %v1145
    %v1147 = vlaneseq
    %v1148 = vshrl.u32 %v1147, 7
    %v1149 = vsub.s32 %v1146, %v1148
    %v1150 = vrot.slane %v1101, %v1149
    %v1151 = vcombine.low %v1142, %v1150
    %v1152 = vcombine.high %v1142, %v1150
    %v1154 = vunpack.c.l.s4 1934713408
    %v1155 = vunpack.c.0.s8 %v1154
    %v1156 = vlaneseq
    %v1157 = vshrl.u32 %v1156, 7
    %v1158 = vsub.s32 %v1155, %v1157
    %v1159 = vrot.slane %v1151, %v1158
    %v1161 = vunpack.c.l.s4 1934713408
    %v1162 = vunpack.c.0.s8 %v1161
    %v1163 = vlaneseq
    %v1164 = vshrl.u32 %v1163, 7
    %v1165 = vsub.s32 %v1162, %v1164
    %v1166 = vrot.slane %v1152, %v1165
    %v1167 = vcombine.high %v1159, 0
    %v1168 = vcombine.high %v1166, 0
    %v1171 = vpack.i.b16 %v1159, %v1125
    %v1173 = vshrl.u32 %v1125, 16
    %v1174 = vshrl.u32 %v1159, 16
    %v1175 = vpack.i.b16 %v1174, %v1173
    %v1179 = vpack.i.b16 %v1167, %v1133
    %v1181 = vshrl.u32 %v1133, 16
    %v1182 = vshrl.u32 %v1167, 16
    %v1183 = vpack.i.b16 %v1182, %v1181
    %v1187 = vpack.i.b16 %v1166, %v1132
    %v1189 = vshrl.u32 %v1132, 16
    %v1190 = vshrl.u32 %v1166, 16
    %v1191 = vpack.i.b16 %v1190, %v1189
    %v1195 = vpack.i.b16 %v1168, %v1134
    %v1197 = vshrl.u32 %v1134, 16
    %v1198 = vshrl.u32 %v1168, 16
    %v1199 = vpack.i.b16 %v1198, %v1197
    %v1201 = vcombine.low %v1171, %v1187
    %v1203 = vunpack.c.l.s4 1983009808
    %v1204 = vunpack.c.0.s8 %v1203
    %v1205 = vlaneseq
    %v1206 = vshrl.u32 %v1205, 7
    %v1207 = vsub.s32 %v1204, %v1206
    %v1208 = vrot.slane %v1201, %v1207
    %v1209 = vcombine.low %v1179, %v1195
    %v1211 = vunpack.c.l.s4 1983009808
    %v1212 = vunpack.c.0.s8 %v1211
    %v1213 = vlaneseq
    %v1214 = vshrl.u32 %v1213, 7
    %v1215 = vsub.s32 %v1212, %v1214
    %v1216 = vrot.slane %v1209, %v1215
    %v1217 = vcombine.low %v1208, %v1216
    %v1219 = vunpack.c.l.s4 1934713408
    %v1220 = vunpack.c.0.s8 %v1219
    %v1221 = vlaneseq
    %v1222 = vshrl.u32 %v1221, 7
    %v1223 = vsub.s32 %v1220, %v1222
    %v1224 = vrot.slane %v1217, %v1223
    %v1225 = vcombine.high %v1224, 0
    %v1226 = vcombine.low %v1175, %v1191
    %v1228 = vunpack.c.l.s4 1983009808
    %v1229 = vunpack.c.0.s8 %v1228
    %v1230 = vlaneseq
    %v1231 = vshrl.u32 %v1230, 7
    %v1232 = vsub.s32 %v1229, %v1231
    %v1233 = vrot.slane %v1226, %v1232
    %v1234 = vcombine.low %v1183, %v1199
    %v1236 = vunpack.c.l.s4 1983009808
    %v1237 = vunpack.c.0.s8 %v1236
    %v1238 = vlaneseq
    %v1239 = vshrl.u32 %v1238, 7
    %v1240 = vsub.s32 %v1237, %v1239
    %v1241 = vrot.slane %v1234, %v1240
    %v1242 = vcombine.low %v1233, %v1241
    %v1244 = vunpack.c.l.s4 1934713408
    %v1245 = vunpack.c.0.s8 %v1244
    %v1246 = vlaneseq
    %v1247 = vshrl.u32 %v1246, 7
    %v1248 = vsub.s32 %v1245, %v1247
    %v1249 = vrot.slane %v1242, %v1248
    %v1250 = vcombine.high %v1249, 0
    %v1253 = vpack.i.b16 %v1249, %v1224
    %v1254 = vshrl.u32 %v1224, 16
    %v1255 = vshrl.u32 %v1249, 16
    %v1256 = vpack.i.b16 %v1255, %v1254
    %v1259 = vpack.i.b16 %v1250, %v1225
    %v1260 = vshrl.u32 %v1225, 16
    %v1261 = vshrl.u32 %v1250, 16
    %v1262 = vpack.i.b16 %v1261, %v1260
    %1264 = vrot.lane.b32.xlu0 %v1093, 96
    %v1265 = vpop.permute.xlu0 %1264
    %1266 = vrot.lane.b32.xlu0 %v1093, 64
    %v1267 = vpop.permute.xlu0 %1266
    %1268 = vrot.lane.b32.xlu0 %v1093, 32
    %v1269 = vpop.permute.xlu0 %1268
    %v1271 = vunpack.c.l.s4 1983009808
    %v1272 = vunpack.c.0.s8 %v1271
    %v1273 = vlaneseq
    %v1274 = vshrl.u32 %v1273, 7
    %v1275 = vsub.s32 %v1272, %v1274
    %v1276 = vrot.slane %v1093, %v1275
    %v1279 = vunpack.c.l.s4 1983009808
    %v1280 = vunpack.c.0.s8 %v1279
    %v1281 = vlaneseq
    %v1282 = vshrl.u32 %v1281, 7
    %v1283 = vsub.s32 %v1280, %v1282
    %v1284 = vrot.slane %v1267, %v1283
    %v1285 = vcombine.low %v1276, %v1284
    %v1286 = vcombine.high %v1276, %v1284
    %v1288 = vunpack.c.l.s4 1934713408
    %v1289 = vunpack.c.0.s8 %v1288
    %v1290 = vlaneseq
    %v1291 = vshrl.u32 %v1290, 7
    %v1292 = vsub.s32 %v1289, %v1291
    %v1293 = vrot.slane %v1285, %v1292
    %v1295 = vunpack.c.l.s4 1934713408
    %v1296 = vunpack.c.0.s8 %v1295
    %v1297 = vlaneseq
    %v1298 = vshrl.u32 %v1297, 7
    %v1299 = vsub.s32 %v1296, %v1298
    %v1300 = vrot.slane %v1286, %v1299
    %v1301 = vcombine.high %v1293, 0
    %v1302 = vcombine.high %v1300, 0
    %v1305 = vunpack.c.l.s4 1983009808
    %v1306 = vunpack.c.0.s8 %v1305
    %v1307 = vlaneseq
    %v1308 = vshrl.u32 %v1307, 7
    %v1309 = vsub.s32 %v1306, %v1308
    %v1310 = vrot.slane %v1265, %v1309
    %v1313 = vunpack.c.l.s4 1983009808
    %v1314 = vunpack.c.0.s8 %v1313
    %v1315 = vlaneseq
    %v1316 = vshrl.u32 %v1315, 7
    %v1317 = vsub.s32 %v1314, %v1316
    %v1318 = vrot.slane %v1269, %v1317
    %v1319 = vcombine.low %v1310, %v1318
    %v1320 = vcombine.high %v1310, %v1318
    %v1322 = vunpack.c.l.s4 1934713408
    %v1323 = vunpack.c.0.s8 %v1322
    %v1324 = vlaneseq
    %v1325 = vshrl.u32 %v1324, 7
    %v1326 = vsub.s32 %v1323, %v1325
    %v1327 = vrot.slane %v1319, %v1326
    %v1329 = vunpack.c.l.s4 1934713408
    %v1330 = vunpack.c.0.s8 %v1329
    %v1331 = vlaneseq
    %v1332 = vshrl.u32 %v1331, 7
    %v1333 = vsub.s32 %v1330, %v1332
    %v1334 = vrot.slane %v1320, %v1333
    %v1335 = vcombine.high %v1327, 0
    %v1336 = vcombine.high %v1334, 0
    %v1339 = vpack.i.b16 %v1327, %v1293
    %v1341 = vshrl.u32 %v1293, 16
    %v1342 = vshrl.u32 %v1327, 16
    %v1343 = vpack.i.b16 %v1342, %v1341
    %v1347 = vpack.i.b16 %v1335, %v1301
    %v1349 = vshrl.u32 %v1301, 16
    %v1350 = vshrl.u32 %v1335, 16
    %v1351 = vpack.i.b16 %v1350, %v1349
    %v1355 = vpack.i.b16 %v1334, %v1300
    %v1357 = vshrl.u32 %v1300, 16
    %v1358 = vshrl.u32 %v1334, 16
    %v1359 = vpack.i.b16 %v1358, %v1357
    %v1363 = vpack.i.b16 %v1336, %v1302
    %v1365 = vshrl.u32 %v1302, 16
    %v1366 = vshrl.u32 %v1336, 16
    %v1367 = vpack.i.b16 %v1366, %v1365
    %v1369 = vcombine.low %v1339, %v1355
    %v1371 = vunpack.c.l.s4 1983009808
    %v1372 = vunpack.c.0.s8 %v1371
    %v1373 = vlaneseq
    %v1374 = vshrl.u32 %v1373, 7
    %v1375 = vsub.s32 %v1372, %v1374
    %v1376 = vrot.slane %v1369, %v1375
    %v1377 = vcombine.low %v1347, %v1363
    %v1379 = vunpack.c.l.s4 1983009808
    %v1380 = vunpack.c.0.s8 %v1379
    %v1381 = vlaneseq
    %v1382 = vshrl.u32 %v1381, 7
    %v1383 = vsub.s32 %v1380, %v1382
    %v1384 = vrot.slane %v1377, %v1383
    %v1385 = vcombine.low %v1376, %v1384
    %v1387 = vunpack.c.l.s4 1934713408
    %v1388 = vunpack.c.0.s8 %v1387
    %v1389 = vlaneseq
    %v1390 = vshrl.u32 %v1389, 7
    %v1391 = vsub.s32 %v1388, %v1390
    %v1392 = vrot.slane %v1385, %v1391
    %v1393 = vcombine.high %v1392, 0
    %v1394 = vcombine.low %v1343, %v1359
    %v1396 = vunpack.c.l.s4 1983009808
    %v1397 = vunpack.c.0.s8 %v1396
    %v1398 = vlaneseq
    %v1399 = vshrl.u32 %v1398, 7
    %v1400 = vsub.s32 %v1397, %v1399
    %v1401 = vrot.slane %v1394, %v1400
    %v1402 = vcombine.low %v1351, %v1367
    %v1404 = vunpack.c.l.s4 1983009808
    %v1405 = vunpack.c.0.s8 %v1404
    %v1406 = vlaneseq
    %v1407 = vshrl.u32 %v1406, 7
    %v1408 = vsub.s32 %v1405, %v1407
    %v1409 = vrot.slane %v1402, %v1408
    %v1410 = vcombine.low %v1401, %v1409
    %v1412 = vunpack.c.l.s4 1934713408
    %v1413 = vunpack.c.0.s8 %v1412
    %v1414 = vlaneseq
    %v1415 = vshrl.u32 %v1414, 7
    %v1416 = vsub.s32 %v1413, %v1415
    %v1417 = vrot.slane %v1410, %v1416
    %v1418 = vcombine.high %v1417, 0
    %v1421 = vpack.i.b16 %v1417, %v1392
    %v1422 = vshrl.u32 %v1392, 16
    %v1423 = vshrl.u32 %v1417, 16
    %v1424 = vpack.i.b16 %v1423, %v1422
    %v1427 = vpack.i.b16 %v1418, %v1393
    %v1428 = vshrl.u32 %v1393, 16
    %v1429 = vshrl.u32 %v1418, 16
    %v1430 = vpack.i.b16 %v1429, %v1428
    %1432 = vrot.lane.b32.xlu0 %v1094, 96
    %v1433 = vpop.permute.xlu0 %1432
    %1434 = vrot.lane.b32.xlu0 %v1094, 64
    %v1435 = vpop.permute.xlu0 %1434
    %1436 = vrot.lane.b32.xlu0 %v1094, 32
    %v1437 = vpop.permute.xlu0 %1436
    %v1439 = vunpack.c.l.s4 1983009808
    %v1440 = vunpack.c.0.s8 %v1439
    %v1441 = vlaneseq
    %v1442 = vshrl.u32 %v1441, 7
    %v1443 = vsub.s32 %v1440, %v1442
    %v1444 = vrot.slane %v1094, %v1443
    %v1447 = vunpack.c.l.s4 1983009808
    %v1448 = vunpack.c.0.s8 %v1447
    %v1449 = vlaneseq
    %v1450 = vshrl.u32 %v1449, 7
    %v1451 = vsub.s32 %v1448, %v1450
    %v1452 = vrot.slane %v1435, %v1451
    %v1453 = vcombine.low %v1444, %v1452
    %v1454 = vcombine.high %v1444, %v1452
    %v1456 = vunpack.c.l.s4 1934713408
    %v1457 = vunpack.c.0.s8 %v1456
    %v1458 = vlaneseq
    %v1459 = vshrl.u32 %v1458, 7
    %v1460 = vsub.s32 %v1457, %v1459
    %v1461 = vrot.slane %v1453, %v1460
    %v1463 = vunpack.c.l.s4 1934713408
    %v1464 = vunpack.c.0.s8 %v1463
    %v1465 = vlaneseq
    %v1466 = vshrl.u32 %v1465, 7
    %v1467 = vsub.s32 %v1464, %v1466
    %v1468 = vrot.slane %v1454, %v1467
    %v1469 = vcombine.high %v1461, 0
    %v1470 = vcombine.high %v1468, 0
    %v1473 = vunpack.c.l.s4 1983009808
    %v1474 = vunpack.c.0.s8 %v1473
    %v1475 = vlaneseq
    %v1476 = vshrl.u32 %v1475, 7
    %v1477 = vsub.s32 %v1474, %v1476
    %v1478 = vrot.slane %v1433, %v1477
    %v1481 = vunpack.c.l.s4 1983009808
    %v1482 = vunpack.c.0.s8 %v1481
    %v1483 = vlaneseq
    %v1484 = vshrl.u32 %v1483, 7
    %v1485 = vsub.s32 %v1482, %v1484
    %v1486 = vrot.slane %v1437, %v1485
    %v1487 = vcombine.low %v1478, %v1486
    %v1488 = vcombine.high %v1478, %v1486
    %v1490 = vunpack.c.l.s4 1934713408
    %v1491 = vunpack.c.0.s8 %v1490
    %v1492 = vlaneseq
    %v1493 = vshrl.u32 %v1492, 7
    %v1494 = vsub.s32 %v1491, %v1493
    %v1495 = vrot.slane %v1487, %v1494
    %v1497 = vunpack.c.l.s4 1934713408
    %v1498 = vunpack.c.0.s8 %v1497
    %v1499 = vlaneseq
    %v1500 = vshrl.u32 %v1499, 7
    %v1501 = vsub.s32 %v1498, %v1500
    %v1502 = vrot.slane %v1488, %v1501
    %v1503 = vcombine.high %v1495, 0
    %v1504 = vcombine.high %v1502, 0
    %v1507 = vpack.i.b16 %v1495, %v1461
    %v1509 = vshrl.u32 %v1461, 16
    %v1510 = vshrl.u32 %v1495, 16
    %v1511 = vpack.i.b16 %v1510, %v1509
    %v1515 = vpack.i.b16 %v1503, %v1469
    %v1517 = vshrl.u32 %v1469, 16
    %v1518 = vshrl.u32 %v1503, 16
    %v1519 = vpack.i.b16 %v1518, %v1517
    %v1523 = vpack.i.b16 %v1502, %v1468
    %v1525 = vshrl.u32 %v1468, 16
    %v1526 = vshrl.u32 %v1502, 16
    %v1527 = vpack.i.b16 %v1526, %v1525
    %v1531 = vpack.i.b16 %v1504, %v1470
    %v1533 = vshrl.u32 %v1470, 16
    %v1534 = vshrl.u32 %v1504, 16
    %v1535 = vpack.i.b16 %v1534, %v1533
    %v1537 = vcombine.low %v1507, %v1523
    %v1539 = vunpack.c.l.s4 1983009808
    %v1540 = vunpack.c.0.s8 %v1539
    %v1541 = vlaneseq
    %v1542 = vshrl.u32 %v1541, 7
    %v1543 = vsub.s32 %v1540, %v1542
    %v1544 = vrot.slane %v1537, %v1543
    %v1545 = vcombine.low %v1515, %v1531
    %v1547 = vunpack.c.l.s4 1983009808
    %v1548 = vunpack.c.0.s8 %v1547
    %v1549 = vlaneseq
    %v1550 = vshrl.u32 %v1549, 7
    %v1551 = vsub.s32 %v1548, %v1550
    %v1552 = vrot.slane %v1545, %v1551
    %v1553 = vcombine.low %v1544, %v1552
    %v1555 = vunpack.c.l.s4 1934713408
    %v1556 = vunpack.c.0.s8 %v1555
    %v1557 = vlaneseq
    %v1558 = vshrl.u32 %v1557, 7
    %v1559 = vsub.s32 %v1556, %v1558
    %v1560 = vrot.slane %v1553, %v1559
    %v1561 = vcombine.high %v1560, 0
    %v1562 = vcombine.low %v1511, %v1527
    %v1564 = vunpack.c.l.s4 1983009808
    %v1565 = vunpack.c.0.s8 %v1564
    %v1566 = vlaneseq
    %v1567 = vshrl.u32 %v1566, 7
    %v1568 = vsub.s32 %v1565, %v1567
    %v1569 = vrot.slane %v1562, %v1568
    %v1570 = vcombine.low %v1519, %v1535
    %v1572 = vunpack.c.l.s4 1983009808
    %v1573 = vunpack.c.0.s8 %v1572
    %v1574 = vlaneseq
    %v1575 = vshrl.u32 %v1574, 7
    %v1576 = vsub.s32 %v1573, %v1575
    %v1577 = vrot.slane %v1570, %v1576
    %v1578 = vcombine.low %v1569, %v1577
    %v1580 = vunpack.c.l.s4 1934713408
    %v1581 = vunpack.c.0.s8 %v1580
    %v1582 = vlaneseq
    %v1583 = vshrl.u32 %v1582, 7
    %v1584 = vsub.s32 %v1581, %v1583
    %v1585 = vrot.slane %v1578, %v1584
    %v1586 = vcombine.high %v1585, 0
    %v1589 = vpack.i.b16 %v1585, %v1560
    %v1590 = vshrl.u32 %v1560, 16
    %v1591 = vshrl.u32 %v1585, 16
    %v1592 = vpack.i.b16 %v1591, %v1590
    %v1595 = vpack.i.b16 %v1586, %v1561
    %v1596 = vshrl.u32 %v1561, 16
    %v1597 = vshrl.u32 %v1586, 16
    %v1598 = vpack.i.b16 %v1597, %v1596
    %vm1599 = vcmask 261120
    %v1601 = vsel %vm1599, %v1253, 0
    %v1604 = vsel %vm1599, %v1421, 0
    %1606 = vmatprep.subr.bf16.mxu0 0
    %1607 = vmatpush1.bf16.xpose.msra.mxu0 %v1604
    %1608 = vmatprep.subr.bf16.mxu0 0
    %1609 = vmatpush1.bf16.xpose.msra.mxu0 0
    %1610 = vmatprep.subr.bf16.mxu0 0
    %1611 = vmatpush1.bf16.xpose.msra.mxu0 0
    %1612 = vmatprep.subr.bf16.mxu0 0
    %1613 = vmatpush1.bf16.xpose.msra.mxu0 0
    %1614 = vmatprep.subr.bf16.mxu0 0
    %1615 = vmatpush1.bf16.xpose.msra.mxu0 0
    %1616 = vmatprep.subr.bf16.mxu0 0
    %1617 = vmatpush1.bf16.xpose.msra.mxu0 0
    %1618 = vmatprep.subr.bf16.mxu0 0
    %1619 = vmatpush1.bf16.xpose.msra.mxu0 0
    %1620 = vmatprep.subr.bf16.mxu0 0
    %1621 = vmatpush1.bf16.xpose.msra.mxu0 0
    %1622 = vmatprep.subr.bf16.mxu0 0
    %1623 = vmatpush1.bf16.xpose.msra.mxu0 0
    %1624 = vmatprep.subr.bf16.mxu0 0
    %1625 = vmatpush1.bf16.xpose.msra.mxu0 0
    %1626 = vmatprep.subr.bf16.mxu0 0
    %1627 = vmatpush1.bf16.xpose.msra.mxu0 0
    %1628 = vmatprep.subr.bf16.mxu0 0
    %1629 = vmatpush1.bf16.xpose.msra.mxu0 0
    %1630 = vmatprep.subr.bf16.mxu0 0
    %1631 = vmatpush1.bf16.xpose.msra.mxu0 0
    %1632 = vmatprep.subr.bf16.mxu0 0
    %1633 = vmatpush1.bf16.xpose.msra.mxu0 0
    %1634 = vmatprep.subr.bf16.mxu0 0
    %1635 = vmatpush1.bf16.xpose.msra.mxu0 0
    %1636 = vmatprep.subr.bf16.mxu0 0
    %1637 = vmatpush1.bf16.xpose.msra.mxu0 0
    %1638 = vmatprep.mubr.bf16.mxu0 0
    %1639 = vmatmul.mubr.bf16.gmra.mrb[0].mxu0 %v1601
    %v1640 = vpop.f32.mrb[0].mxu0
    %v1641 = vadd.f32 0.0, %v1640
    %v1642 = vpop.f32.mrb[0].mxu0
    %v1643 = vpop.f32.mrb[0].mxu0
    %v1644 = vpop.f32.mrb[0].mxu0
    %1645 = vdwg.mxu0
    %v1647 = vsel %vm1599, %v1256, 0
    %v1650 = vsel %vm1599, %v1424, 0
    %1652 = vmatprep.subr.bf16.mxu0 0
    %1653 = vmatpush1.bf16.xpose.msra.mxu0 %v1650
    %1654 = vmatprep.subr.bf16.mxu0 0
    %1655 = vmatpush1.bf16.xpose.msra.mxu0 0
    %1656 = vmatprep.subr.bf16.mxu0 0
    %1657 = vmatpush1.bf16.xpose.msra.mxu0 0
    %1658 = vmatprep.subr.bf16.mxu0 0
    %1659 = vmatpush1.bf16.xpose.msra.mxu0 0
    %1660 = vmatprep.subr.bf16.mxu0 0
    %1661 = vmatpush1.bf16.xpose.msra.mxu0 0
    %1662 = vmatprep.subr.bf16.mxu0 0
    %1663 = vmatpush1.bf16.xpose.msra.mxu0 0
    %1664 = vmatprep.subr.bf16.mxu0 0
    %1665 = vmatpush1.bf16.xpose.msra.mxu0 0
    %1666 = vmatprep.subr.bf16.mxu0 0
    %1667 = vmatpush1.bf16.xpose.msra.mxu0 0
    %1668 = vmatprep.subr.bf16.mxu0 0
    %1669 = vmatpush1.bf16.xpose.msra.mxu0 0
    %1670 = vmatprep.subr.bf16.mxu0 0
    %1671 = vmatpush1.bf16.xpose.msra.mxu0 0
    %1672 = vmatprep.subr.bf16.mxu0 0
    %1673 = vmatpush1.bf16.xpose.msra.mxu0 0
    %1674 = vmatprep.subr.bf16.mxu0 0
    %1675 = vmatpush1.bf16.xpose.msra.mxu0 0
    %1676 = vmatprep.subr.bf16.mxu0 0
    %1677 = vmatpush1.bf16.xpose.msra.mxu0 0
    %1678 = vmatprep.subr.bf16.mxu0 0
    %1679 = vmatpush1.bf16.xpose.msra.mxu0 0
    %1680 = vmatprep.subr.bf16.mxu0 0
    %1681 = vmatpush1.bf16.xpose.msra.mxu0 0
    %1682 = vmatprep.subr.bf16.mxu0 0
    %1683 = vmatpush1.bf16.xpose.msra.mxu0 0
    %1684 = vmatprep.mubr.bf16.mxu0 0
    %1685 = vmatmul.mubr.bf16.gmra.mrb[0].mxu0 %v1647
    %v1686 = vpop.f32.mrb[0].mxu0
    %v1687 = vadd.f32 0.0, %v1686
    %v1688 = vpop.f32.mrb[0].mxu0
    %v1689 = vpop.f32.mrb[0].mxu0
    %v1690 = vpop.f32.mrb[0].mxu0
    %1691 = vdwg.mxu0
    %v1693 = vsel %vm1599, %v1259, 0
    %v1696 = vsel %vm1599, %v1427, 0
    %1698 = vmatprep.subr.bf16.mxu0 0
    %1699 = vmatpush1.bf16.xpose.msra.mxu0 %v1696
    %1700 = vmatprep.subr.bf16.mxu0 0
    %1701 = vmatpush1.bf16.xpose.msra.mxu0 0
    %1702 = vmatprep.subr.bf16.mxu0 0
    %1703 = vmatpush1.bf16.xpose.msra.mxu0 0
    %1704 = vmatprep.subr.bf16.mxu0 0
    %1705 = vmatpush1.bf16.xpose.msra.mxu0 0
    %1706 = vmatprep.subr.bf16.mxu0 0
    %1707 = vmatpush1.bf16.xpose.msra.mxu0 0
    %1708 = vmatprep.subr.bf16.mxu0 0
    %1709 = vmatpush1.bf16.xpose.msra.mxu0 0
    %1710 = vmatprep.subr.bf16.mxu0 0
    %1711 = vmatpush1.bf16.xpose.msra.mxu0 0
    %1712 = vmatprep.subr.bf16.mxu0 0
    %1713 = vmatpush1.bf16.xpose.msra.mxu0 0
    %1714 = vmatprep.subr.bf16.mxu0 0
    %1715 = vmatpush1.bf16.xpose.msra.mxu0 0
    %1716 = vmatprep.subr.bf16.mxu0 0
    %1717 = vmatpush1.bf16.xpose.msra.mxu0 0
    %1718 = vmatprep.subr.bf16.mxu0 0
    %1719 = vmatpush1.bf16.xpose.msra.mxu0 0
    %1720 = vmatprep.subr.bf16.mxu0 0
    %1721 = vmatpush1.bf16.xpose.msra.mxu0 0
    %1722 = vmatprep.subr.bf16.mxu0 0
    %1723 = vmatpush1.bf16.xpose.msra.mxu0 0
    %1724 = vmatprep.subr.bf16.mxu0 0
    %1725 = vmatpush1.bf16.xpose.msra.mxu0 0
    %1726 = vmatprep.subr.bf16.mxu0 0
    %1727 = vmatpush1.bf16.xpose.msra.mxu0 0
    %1728 = vmatprep.subr.bf16.mxu0 0
    %1729 = vmatpush1.bf16.xpose.msra.mxu0 0
    %1730 = vmatprep.mubr.bf16.mxu0 0
    %1731 = vmatmul.mubr.bf16.gmra.mrb[0].mxu0 %v1693
    %v1732 = vpop.f32.mrb[0].mxu0
    %v1733 = vadd.f32 0.0, %v1732
    %v1734 = vpop.f32.mrb[0].mxu0
    %v1735 = vpop.f32.mrb[0].mxu0
    %v1736 = vpop.f32.mrb[0].mxu0
    %1737 = vdwg.mxu0
    %v1739 = vsel %vm1599, %v1262, 0
    %v1742 = vsel %vm1599, %v1430, 0
    %1744 = vmatprep.subr.bf16.mxu0 0
    %1745 = vmatpush1.bf16.xpose.msra.mxu0 %v1742
    %1746 = vmatprep.subr.bf16.mxu0 0
    %1747 = vmatpush1.bf16.xpose.msra.mxu0 0
    %1748 = vmatprep.subr.bf16.mxu0 0
    %1749 = vmatpush1.bf16.xpose.msra.mxu0 0
    %1750 = vmatprep.subr.bf16.mxu0 0
    %1751 = vmatpush1.bf16.xpose.msra.mxu0 0
    %1752 = vmatprep.subr.bf16.mxu0 0
    %1753 = vmatpush1.bf16.xpose.msra.mxu0 0
    %1754 = vmatprep.subr.bf16.mxu0 0
    %1755 = vmatpush1.bf16.xpose.msra.mxu0 0
    %1756 = vmatprep.subr.bf16.mxu0 0
    %1757 = vmatpush1.bf16.xpose.msra.mxu0 0
    %1758 = vmatprep.subr.bf16.mxu0 0
    %1759 = vmatpush1.bf16.xpose.msra.mxu0 0
    %1760 = vmatprep.subr.bf16.mxu0 0
    %1761 = vmatpush1.bf16.xpose.msra.mxu0 0
    %1762 = vmatprep.subr.bf16.mxu0 0
    %1763 = vmatpush1.bf16.xpose.msra.mxu0 0
    %1764 = vmatprep.subr.bf16.mxu0 0
    %1765 = vmatpush1.bf16.xpose.msra.mxu0 0
    %1766 = vmatprep.subr.bf16.mxu0 0
    %1767 = vmatpush1.bf16.xpose.msra.mxu0 0
    %1768 = vmatprep.subr.bf16.mxu0 0
    %1769 = vmatpush1.bf16.xpose.msra.mxu0 0
    %1770 = vmatprep.subr.bf16.mxu0 0
    %1771 = vmatpush1.bf16.xpose.msra.mxu0 0
    %1772 = vmatprep.subr.bf16.mxu0 0
    %1773 = vmatpush1.bf16.xpose.msra.mxu0 0
    %1774 = vmatprep.subr.bf16.mxu0 0
    %1775 = vmatpush1.bf16.xpose.msra.mxu0 0
    %1776 = vmatprep.mubr.bf16.mxu0 0
    %1777 = vmatmul.mubr.bf16.gmra.mrb[0].mxu0 %v1739
    %v1778 = vpop.f32.mrb[0].mxu0
    %v1779 = vadd.f32 0.0, %v1778
    %v1780 = vpop.f32.mrb[0].mxu0
    %v1781 = vpop.f32.mrb[0].mxu0
    %v1782 = vpop.f32.mrb[0].mxu0
    %1783 = vdwg.mxu0
    %vm1784 = vcmask 64512
    %v1785 = vsel %vm1784, %v1641, -inf
    %1786 = vmax.xlane.f32.xlu0 %v1785
    %v1787 = vpop.xlane.xlu0 %1786
    %v1788 = vsel %vm1784, %v1687, -inf
    %1789 = vmax.xlane.f32.xlu0 %v1788
    %v1790 = vpop.xlane.xlu0 %1789
    %v1791 = vsel %vm1784, %v1733, -inf
    %1792 = vmax.xlane.f32.xlu0 %v1791
    %v1793 = vpop.xlane.xlu0 %1792
    %v1794 = vsel %vm1784, %v1779, -inf
    %1795 = vmax.xlane.f32.xlu0 %v1794
    %v1796 = vpop.xlane.xlu0 %1795
    %v1797 = vsub.f32 %v1641, %v1787
    %v1798 = vsub.f32 %v1687, %v1790
    %v1799 = vsub.f32 %v1733, %v1793
    %v1800 = vsub.f32 %v1779, %v1796
    %v1801 = vmul.f32 %v1797, 1.442695
    %v1802 = vpow.pop %v1801
    %v1803 = vmul.f32 %v1798, 1.442695
    %v1804 = vpow.pop %v1803
    %v1805 = vmul.f32 %v1799, 1.442695
    %v1806 = vpow.pop %v1805
    %v1807 = vmul.f32 %v1800, 1.442695
    %v1808 = vpow.pop %v1807
    %v1809 = vsel %vm1784, %v1802, 0.0
    %1810 = vadd.xlane.f32.xlu0 %v1809
    %v1811 = vpop.xlane.xlu0 %1810
    %v1812 = vsel %vm1784, %v1804, 0.0
    %1813 = vadd.xlane.f32.xlu0 %v1812
    %v1814 = vpop.xlane.xlu0 %1813
    %v1815 = vsel %vm1784, %v1806, 0.0
    %1816 = vadd.xlane.f32.xlu0 %v1815
    %v1817 = vpop.xlane.xlu0 %1816
    %v1818 = vsel %vm1784, %v1808, 0.0
    %1819 = vadd.xlane.f32.xlu0 %v1818
    %v1820 = vpop.xlane.xlu0 %1819
    %v1821 = vrcp.pop %v1811
    %v1822 = vrcp.pop %v1814
    %v1823 = vrcp.pop %v1817
    %v1824 = vrcp.pop %v1820
    %v1825 = vmul.f32 %v1802, %v1821
    %v1826 = vmul.f32 %v1804, %v1822
    %v1827 = vmul.f32 %v1806, %v1823
    %v1828 = vmul.f32 %v1808, %v1824
    %v1829 = vpack.c.bf16 %v1825, %v1825
    %v1830 = vpack.c.bf16 %v1826, %v1826
    %v1831 = vpack.c.bf16 %v1827, %v1827
    %v1832 = vpack.c.bf16 %v1828, %v1828
    %v1834 = vsel %vm1784, %v1829, 0
    %vm1836 = vcmask 1043456
    %v1838 = vsel %vm1836, %v1589, 0
    %1840 = vmatprep.subr.bf16.mxu0 0
    %1841 = vmatpush1.bf16.msra.mxu0 %v1838
    %1842 = vmatprep.subr.bf16.mxu0 0
    %1843 = vmatpush1.bf16.msra.mxu0 0
    %1844 = vmatprep.subr.bf16.mxu0 0
    %1845 = vmatpush1.bf16.msra.mxu0 0
    %1846 = vmatprep.subr.bf16.mxu0 0
    %1847 = vmatpush1.bf16.msra.mxu0 0
    %1848 = vmatprep.subr.bf16.mxu0 0
    %1849 = vmatpush1.bf16.msra.mxu0 0
    %1850 = vmatprep.subr.bf16.mxu0 0
    %1851 = vmatpush1.bf16.msra.mxu0 0
    %1852 = vmatprep.subr.bf16.mxu0 0
    %1853 = vmatpush1.bf16.msra.mxu0 0
    %1854 = vmatprep.subr.bf16.mxu0 0
    %1855 = vmatpush1.bf16.msra.mxu0 0
    %1856 = vmatprep.subr.bf16.mxu0 0
    %1857 = vmatpush1.bf16.msra.mxu0 0
    %1858 = vmatprep.subr.bf16.mxu0 0
    %1859 = vmatpush1.bf16.msra.mxu0 0
    %1860 = vmatprep.subr.bf16.mxu0 0
    %1861 = vmatpush1.bf16.msra.mxu0 0
    %1862 = vmatprep.subr.bf16.mxu0 0
    %1863 = vmatpush1.bf16.msra.mxu0 0
    %1864 = vmatprep.subr.bf16.mxu0 0
    %1865 = vmatpush1.bf16.msra.mxu0 0
    %1866 = vmatprep.subr.bf16.mxu0 0
    %1867 = vmatpush1.bf16.msra.mxu0 0
    %1868 = vmatprep.subr.bf16.mxu0 0
    %1869 = vmatpush1.bf16.msra.mxu0 0
    %1870 = vmatprep.subr.bf16.mxu0 0
    %1871 = vmatpush1.bf16.msra.mxu0 0
    %1872 = vmatprep.mubr.bf16.mxu0 0
    %1873 = vmatmul.mubr.bf16.gmra.mrb[0].mxu0 %v1834
    %v1874 = vpop.f32.mrb[0].mxu0
    %v1875 = vadd.f32 0.0, %v1874
    %v1876 = vpop.f32.mrb[0].mxu0
    %v1877 = vpop.f32.mrb[0].mxu0
    %v1878 = vpop.f32.mrb[0].mxu0
    %1879 = vdwg.mxu0
    %v1881 = vsel %vm1784, %v1830, 0
    %v1884 = vsel %vm1836, %v1592, 0
    %1886 = vmatprep.subr.bf16.mxu0 0
    %1887 = vmatpush1.bf16.msra.mxu0 %v1884
    %1888 = vmatprep.subr.bf16.mxu0 0
    %1889 = vmatpush1.bf16.msra.mxu0 0
    %1890 = vmatprep.subr.bf16.mxu0 0
    %1891 = vmatpush1.bf16.msra.mxu0 0
    %1892 = vmatprep.subr.bf16.mxu0 0
    %1893 = vmatpush1.bf16.msra.mxu0 0
    %1894 = vmatprep.subr.bf16.mxu0 0
    %1895 = vmatpush1.bf16.msra.mxu0 0
    %1896 = vmatprep.subr.bf16.mxu0 0
    %1897 = vmatpush1.bf16.msra.mxu0 0
    %1898 = vmatprep.subr.bf16.mxu0 0
    %1899 = vmatpush1.bf16.msra.mxu0 0
    %1900 = vmatprep.subr.bf16.mxu0 0
    %1901 = vmatpush1.bf16.msra.mxu0 0
    %1902 = vmatprep.subr.bf16.mxu0 0
    %1903 = vmatpush1.bf16.msra.mxu0 0
    %1904 = vmatprep.subr.bf16.mxu0 0
    %1905 = vmatpush1.bf16.msra.mxu0 0
    %1906 = vmatprep.subr.bf16.mxu0 0
    %1907 = vmatpush1.bf16.msra.mxu0 0
    %1908 = vmatprep.subr.bf16.mxu0 0
    %1909 = vmatpush1.bf16.msra.mxu0 0
    %1910 = vmatprep.subr.bf16.mxu0 0
    %1911 = vmatpush1.bf16.msra.mxu0 0
    %1912 = vmatprep.subr.bf16.mxu0 0
    %1913 = vmatpush1.bf16.msra.mxu0 0
    %1914 = vmatprep.subr.bf16.mxu0 0
    %1915 = vmatpush1.bf16.msra.mxu0 0
    %1916 = vmatprep.subr.bf16.mxu0 0
    %1917 = vmatpush1.bf16.msra.mxu0 0
    %1918 = vmatprep.mubr.bf16.mxu0 0
    %1919 = vmatmul.mubr.bf16.gmra.mrb[0].mxu0 %v1881
    %v1920 = vpop.f32.mrb[0].mxu0
    %v1921 = vadd.f32 0.0, %v1920
    %v1922 = vpop.f32.mrb[0].mxu0
    %v1923 = vpop.f32.mrb[0].mxu0
    %v1924 = vpop.f32.mrb[0].mxu0
    %1925 = vdwg.mxu0
    %v1927 = vsel %vm1784, %v1831, 0
    %v1930 = vsel %vm1836, %v1595, 0
    %1932 = vmatprep.subr.bf16.mxu0 0
    %1933 = vmatpush1.bf16.msra.mxu0 %v1930
    %1934 = vmatprep.subr.bf16.mxu0 0
    %1935 = vmatpush1.bf16.msra.mxu0 0
    %1936 = vmatprep.subr.bf16.mxu0 0
    %1937 = vmatpush1.bf16.msra.mxu0 0
    %1938 = vmatprep.subr.bf16.mxu0 0
    %1939 = vmatpush1.bf16.msra.mxu0 0
    %1940 = vmatprep.subr.bf16.mxu0 0
    %1941 = vmatpush1.bf16.msra.mxu0 0
    %1942 = vmatprep.subr.bf16.mxu0 0
    %1943 = vmatpush1.bf16.msra.mxu0 0
    %1944 = vmatprep.subr.bf16.mxu0 0
    %1945 = vmatpush1.bf16.msra.mxu0 0
    %1946 = vmatprep.subr.bf16.mxu0 0
    %1947 = vmatpush1.bf16.msra.mxu0 0
    %1948 = vmatprep.subr.bf16.mxu0 0
    %1949 = vmatpush1.bf16.msra.mxu0 0
    %1950 = vmatprep.subr.bf16.mxu0 0
    %1951 = vmatpush1.bf16.msra.mxu0 0
    %1952 = vmatprep.subr.bf16.mxu0 0
    %1953 = vmatpush1.bf16.msra.mxu0 0
    %1954 = vmatprep.subr.bf16.mxu0 0
    %1955 = vmatpush1.bf16.msra.mxu0 0
    %1956 = vmatprep.subr.bf16.mxu0 0
    %1957 = vmatpush1.bf16.msra.mxu0 0
    %1958 = vmatprep.subr.bf16.mxu0 0
    %1959 = vmatpush1.bf16.msra.mxu0 0
    %1960 = vmatprep.subr.bf16.mxu0 0
    %1961 = vmatpush1.bf16.msra.mxu0 0
    %1962 = vmatprep.subr.bf16.mxu0 0
    %1963 = vmatpush1.bf16.msra.mxu0 0
    %1964 = vmatprep.mubr.bf16.mxu0 0
    %1965 = vmatmul.mubr.bf16.gmra.mrb[0].mxu0 %v1927
    %v1966 = vpop.f32.mrb[0].mxu0
    %v1967 = vadd.f32 0.0, %v1966
    %v1968 = vpop.f32.mrb[0].mxu0
    %v1969 = vpop.f32.mrb[0].mxu0
    %v1970 = vpop.f32.mrb[0].mxu0
    %1971 = vdwg.mxu0
    %v1973 = vsel %vm1784, %v1832, 0
    %v1976 = vsel %vm1836, %v1598, 0
    %1978 = vmatprep.subr.bf16.mxu0 0
    %1979 = vmatpush1.bf16.msra.mxu0 %v1976
    %1980 = vmatprep.subr.bf16.mxu0 0
    %1981 = vmatpush1.bf16.msra.mxu0 0
    %1982 = vmatprep.subr.bf16.mxu0 0
    %1983 = vmatpush1.bf16.msra.mxu0 0
    %1984 = vmatprep.subr.bf16.mxu0 0
    %1985 = vmatpush1.bf16.msra.mxu0 0
    %1986 = vmatprep.subr.bf16.mxu0 0
    %1987 = vmatpush1.bf16.msra.mxu0 0
    %1988 = vmatprep.subr.bf16.mxu0 0
    %1989 = vmatpush1.bf16.msra.mxu0 0
    %1990 = vmatprep.subr.bf16.mxu0 0
    %1991 = vmatpush1.bf16.msra.mxu0 0
    %1992 = vmatprep.subr.bf16.mxu0 0
    %1993 = vmatpush1.bf16.msra.mxu0 0
    %1994 = vmatprep.subr.bf16.mxu0 0
    %1995 = vmatpush1.bf16.msra.mxu0 0
    %1996 = vmatprep.subr.bf16.mxu0 0
    %1997 = vmatpush1.bf16.msra.mxu0 0
    %1998 = vmatprep.subr.bf16.mxu0 0
    %1999 = vmatpush1.bf16.msra.mxu0 0
    %2000 = vmatprep.subr.bf16.mxu0 0
    %2001 = vmatpush1.bf16.msra.mxu0 0
    %2002 = vmatprep.subr.bf16.mxu0 0
    %2003 = vmatpush1.bf16.msra.mxu0 0
    %2004 = vmatprep.subr.bf16.mxu0 0
    %2005 = vmatpush1.bf16.msra.mxu0 0
    %2006 = vmatprep.subr.bf16.mxu0 0
    %2007 = vmatpush1.bf16.msra.mxu0 0
    %2008 = vmatprep.subr.bf16.mxu0 0
    %2009 = vmatpush1.bf16.msra.mxu0 0
    %2010 = vmatprep.mubr.bf16.mxu0 0
    %2011 = vmatmul.mubr.bf16.gmra.mrb[0].mxu0 %v1973
    %v2012 = vpop.f32.mrb[0].mxu0
    %v2013 = vadd.f32 0.0, %v2012
    %v2014 = vpop.f32.mrb[0].mxu0
    %v2015 = vpop.f32.mrb[0].mxu0
    %v2016 = vpop.f32.mrb[0].mxu0
    %2017 = vdwg.mxu0
    %v2018 = vcombine.low %v1875, %v1967
    %v2019 = vcombine.high %v1875, %v1967
    %v2021 = vunpack.c.l.s4 1983009808
    %v2022 = vunpack.c.0.s8 %v2021
    %v2023 = vlaneseq
    %v2024 = vshrl.u32 %v2023, 7
    %v2025 = vsub.s32 %v2022, %v2024
    %v2026 = vrot.slane %v2018, %v2025
    %v2028 = vunpack.c.l.s4 1983009808
    %v2029 = vunpack.c.0.s8 %v2028
    %v2030 = vlaneseq
    %v2031 = vshrl.u32 %v2030, 7
    %v2032 = vsub.s32 %v2029, %v2031
    %v2033 = vrot.slane %v2019, %v2032
    %v2034 = vcombine.low %v1921, %v2013
    %v2035 = vcombine.high %v1921, %v2013
    %v2037 = vunpack.c.l.s4 1983009808
    %v2038 = vunpack.c.0.s8 %v2037
    %v2039 = vlaneseq
    %v2040 = vshrl.u32 %v2039, 7
    %v2041 = vsub.s32 %v2038, %v2040
    %v2042 = vrot.slane %v2034, %v2041
    %v2044 = vunpack.c.l.s4 1983009808
    %v2045 = vunpack.c.0.s8 %v2044
    %v2046 = vlaneseq
    %v2047 = vshrl.u32 %v2046, 7
    %v2048 = vsub.s32 %v2045, %v2047
    %v2049 = vrot.slane %v2035, %v2048
    %v2050 = vcombine.low %v2026, %v2042
    %v2051 = vcombine.high %v2026, %v2042
    %v2053 = vunpack.c.l.s4 1934713408
    %v2054 = vunpack.c.0.s8 %v2053
    %v2055 = vlaneseq
    %v2056 = vshrl.u32 %v2055, 7
    %v2057 = vsub.s32 %v2054, %v2056
    %v2058 = vrot.slane %v2050, %v2057
    %v2060 = vunpack.c.l.s4 1934713408
    %v2061 = vunpack.c.0.s8 %v2060
    %v2062 = vlaneseq
    %v2063 = vshrl.u32 %v2062, 7
    %v2064 = vsub.s32 %v2061, %v2063
    %v2065 = vrot.slane %v2051, %v2064
    %v2066 = vcombine.low %v2033, %v2049
    %v2067 = vcombine.high %v2033, %v2049
    %v2069 = vunpack.c.l.s4 1934713408
    %v2070 = vunpack.c.0.s8 %v2069
    %v2071 = vlaneseq
    %v2072 = vshrl.u32 %v2071, 7
    %v2073 = vsub.s32 %v2070, %v2072
    %v2074 = vrot.slane %v2066, %v2073
    %v2076 = vunpack.c.l.s4 1934713408
    %v2077 = vunpack.c.0.s8 %v2076
    %v2078 = vlaneseq
    %v2079 = vshrl.u32 %v2078, 7
    %v2080 = vsub.s32 %v2077, %v2079
    %v2081 = vrot.slane %v2067, %v2080
    %v2082 = vcombine.high %v2058, 0.0
    %v2083 = vcombine.high %v2065, 0.0
    %v2084 = vcombine.high %v2074, 0.0
    %v2085 = vcombine.high %v2081, 0.0
    %v2086 = vcombine.low %v2058, %v2065
    %v2088 = vunpack.c.l.s4 1983009808
    %v2089 = vunpack.c.0.s8 %v2088
    %v2090 = vlaneseq
    %v2091 = vshrl.u32 %v2090, 7
    %v2092 = vsub.s32 %v2089, %v2091
    %v2093 = vrot.slane %v2086, %v2092
    %v2094 = vcombine.low %v2082, %v2083
    %v2096 = vunpack.c.l.s4 1983009808
    %v2097 = vunpack.c.0.s8 %v2096
    %v2098 = vlaneseq
    %v2099 = vshrl.u32 %v2098, 7
    %v2100 = vsub.s32 %v2097, %v2099
    %v2101 = vrot.slane %v2094, %v2100
    %v2102 = vcombine.low %v2074, %v2081
    %v2104 = vunpack.c.l.s4 1983009808
    %v2105 = vunpack.c.0.s8 %v2104
    %v2106 = vlaneseq
    %v2107 = vshrl.u32 %v2106, 7
    %v2108 = vsub.s32 %v2105, %v2107
    %v2109 = vrot.slane %v2102, %v2108
    %v2110 = vcombine.low %v2084, %v2085
    %v2112 = vunpack.c.l.s4 1983009808
    %v2113 = vunpack.c.0.s8 %v2112
    %v2114 = vlaneseq
    %v2115 = vshrl.u32 %v2114, 7
    %v2116 = vsub.s32 %v2113, %v2115
    %v2117 = vrot.slane %v2110, %v2116
    %v2118 = vcombine.low %v2093, %v2101
    %v2119 = vcombine.high %v2093, %v2101
    %v2121 = vunpack.c.l.s4 1934713408
    %v2122 = vunpack.c.0.s8 %v2121
    %v2123 = vlaneseq
    %v2124 = vshrl.u32 %v2123, 7
    %v2125 = vsub.s32 %v2122, %v2124
    %v2126 = vrot.slane %v2118, %v2125
    %v2128 = vunpack.c.l.s4 1934713408
    %v2129 = vunpack.c.0.s8 %v2128
    %v2130 = vlaneseq
    %v2131 = vshrl.u32 %v2130, 7
    %v2132 = vsub.s32 %v2129, %v2131
    %v2133 = vrot.slane %v2119, %v2132
    %v2134 = vcombine.low %v2109, %v2117
    %v2135 = vcombine.high %v2109, %v2117
    %v2137 = vunpack.c.l.s4 1934713408
    %v2138 = vunpack.c.0.s8 %v2137
    %v2139 = vlaneseq
    %v2140 = vshrl.u32 %v2139, 7
    %v2141 = vsub.s32 %v2138, %v2140
    %v2142 = vrot.slane %v2134, %v2141
    %v2144 = vunpack.c.l.s4 1934713408
    %v2145 = vunpack.c.0.s8 %v2144
    %v2146 = vlaneseq
    %v2147 = vshrl.u32 %v2146, 7
    %v2148 = vsub.s32 %v2145, %v2147
    %v2149 = vrot.slane %v2135, %v2148
    %v2150 = vcombine.low %v2126, %v2142
    %v2151 = vcombine.high %v2126, %v2142
    %v2152 = vcombine.low %v2133, %v2149
    %v2153 = vcombine.high %v2133, %v2149
    %2155 = vrot.lane.b32.xlu0 %v2151, 32
    %v2156 = vpop.permute.xlu0 %2155
    %2159 = vrot.lane.b32.xlu0 %v2152, 64
    %v2160 = vpop.permute.xlu0 %2159
    %2163 = vrot.lane.b32.xlu0 %v2153, 96
    %v2164 = vpop.permute.xlu0 %2163
    %v2166 = vsel %vm1599, %v2150, %v2156
    %vm2167 = vcmask 523264
    %v2168 = vsel %vm2167, %v2166, %v2160
    %vm2169 = vcmask 785408
    %v2170 = vsel %vm2169, %v2168, %v2164
    %v2171 = vpack.c.bf16 %v2170, %v2170
    %v2172 = vld [vmem:[%s6] sm:$0xf]
    %v2173 = vld [vmem:[%s6 + $0x4] sm:$0xf]
    %v2174 = vld [vmem:[%s6 + $0x8] sm:$0xf]
    %v2175 = vld [vmem:[%s6 + $0xc] sm:$0xf]
    %v2176 = vld [vmem:[%s6 + $0x10] sm:$0xf]
    %v2177 = vld [vmem:[%s6 + $0x14] sm:$0xf]
    %v2178 = vld [vmem:[%s6 + $0x18] sm:$0xf]
    %v2179 = vld [vmem:[%s6 + $0x1c] sm:$0xf]
    %v2180 = vld [vmem:[%s6 + $0x20] sm:$0xf]
    %v2181 = vld [vmem:[%s6 + $0x24] sm:$0xf]
    %v2182 = vld [vmem:[%s6 + $0x28] sm:$0xf]
    %v2183 = vld [vmem:[%s6 + $0x2c] sm:$0xf]
    %v2184 = vld [vmem:[%s6 + $0x30] sm:$0xf]
    %v2185 = vld [vmem:[%s6 + $0x34] sm:$0xf]
    %v2186 = vld [vmem:[%s6 + $0x38] sm:$0xf]
    %v2187 = vld [vmem:[%s6 + $0x3c] sm:$0xf]
    %v2188 = vld [vmem:[%s7] sm:$0x1]
    %v2190 = vlaneseq
    %v2191 = vshrl.u32 %v2190, 7
    %v2192 = vsub.s32 0, %v2191
    %v2193 = vrot.slane %v2188, %v2192
    %v2211 = vunpack.c.l.b16 %v2172
    %v2212 = vunpack.c.l.b16 %v2173
    %v2213 = vunpack.c.l.b16 %v2174
    %v2214 = vunpack.c.l.b16 %v2175
    %v2215 = vunpack.c.l.b16 %v2176
    %v2216 = vunpack.c.l.b16 %v2177
    %v2217 = vunpack.c.l.b16 %v2178
    %v2218 = vunpack.c.l.b16 %v2179
    %v2219 = vunpack.c.l.b16 %v2180
    %v2220 = vunpack.c.l.b16 %v2181
    %v2221 = vunpack.c.l.b16 %v2182
    %v2222 = vunpack.c.l.b16 %v2183
    %v2223 = vunpack.c.l.b16 %v2184
    %v2224 = vunpack.c.l.b16 %v2185
    %v2225 = vunpack.c.l.b16 %v2186
    %v2226 = vunpack.c.l.b16 %v2187
    %v2227 = vpack.c.b16 %v2212, %v2211
    %v2228 = vpack.c.b16 %v2214, %v2213
    %v2229 = vpack.c.b16 %v2216, %v2215
    %v2230 = vpack.c.b16 %v2218, %v2217
    %v2231 = vpack.c.b16 %v2220, %v2219
    %v2232 = vpack.c.b16 %v2222, %v2221
    %v2233 = vpack.c.b16 %v2224, %v2223
    %v2234 = vpack.c.b16 %v2226, %v2225
    %2243 = vmatprep.subr.bf16.mxu0 0
    %2244 = vmatpush1.bf16.msra.mxu0 %v2227
    %2245 = vmatprep.subr.bf16.mxu0 0
    %2246 = vmatpush1.bf16.msra.mxu0 %v2228
    %2247 = vmatprep.subr.bf16.mxu0 0
    %2248 = vmatpush1.bf16.msra.mxu0 %v2229
    %2249 = vmatprep.subr.bf16.mxu0 0
    %2250 = vmatpush1.bf16.msra.mxu0 %v2230
    %2251 = vmatprep.subr.bf16.mxu0 0
    %2252 = vmatpush1.bf16.msra.mxu0 %v2231
    %2253 = vmatprep.subr.bf16.mxu0 0
    %2254 = vmatpush1.bf16.msra.mxu0 %v2232
    %2255 = vmatprep.subr.bf16.mxu0 0
    %2256 = vmatpush1.bf16.msra.mxu0 %v2233
    %2257 = vmatprep.subr.bf16.mxu0 0
    %2258 = vmatpush1.bf16.msra.mxu0 %v2234
    %2259 = vmatprep.subr.bf16.mxu0 0
    %2260 = vmatpush1.bf16.msra.mxu0 0
    %2261 = vmatprep.subr.bf16.mxu0 0
    %2262 = vmatpush1.bf16.msra.mxu0 0
    %2263 = vmatprep.subr.bf16.mxu0 0
    %2264 = vmatpush1.bf16.msra.mxu0 0
    %2265 = vmatprep.subr.bf16.mxu0 0
    %2266 = vmatpush1.bf16.msra.mxu0 0
    %2267 = vmatprep.subr.bf16.mxu0 0
    %2268 = vmatpush1.bf16.msra.mxu0 0
    %2269 = vmatprep.subr.bf16.mxu0 0
    %2270 = vmatpush1.bf16.msra.mxu0 0
    %2271 = vmatprep.subr.bf16.mxu0 0
    %2272 = vmatpush1.bf16.msra.mxu0 0
    %2273 = vmatprep.subr.bf16.mxu0 0
    %2274 = vmatpush1.bf16.msra.mxu0 0
    %2275 = vmatprep.mubr.bf16.mxu0 0
    %2276 = vmatmul.mubr.bf16.gmra.mrb[0].mxu0 %v2171
    %v2277 = vpop.f32.mrb[0].mxu0
    %v2278 = vadd.f32 %v2193, %v2277
    %v2279 = vpop.f32.mrb[0].mxu0
    %v2280 = vpop.f32.mrb[0].mxu0
    %v2281 = vpop.f32.mrb[0].mxu0
    %2282 = vdwg.mxu0
    %v2284 = vrot.slane %v2278, 1
    %v2285 = vrot.slane %v2278, 2
    %v2286 = vrot.slane %v2278, 3
    %v2287 = vrot.slane %v2278, 4
    %v2288 = vrot.slane %v2278, 5
    %v2289 = vrot.slane %v2278, 6
    %v2290 = vrot.slane %v2278, 7
    %v2299 = vadd.f32 %v632, %v2278
    %v2300 = vadd.f32 %v634, %v2284
    %v2301 = vadd.f32 %v636, %v2285
    %v2302 = vadd.f32 %v638, %v2286
    %v2303 = vadd.f32 %v640, %v2287
    %v2304 = vadd.f32 %v642, %v2288
    %v2305 = vadd.f32 %v644, %v2289
    %v2306 = vadd.f32 %v646, %v2290
    %v2307 = vld [vmem:[%s10] sm:$0x1]
    %v2308 = vld [vmem:[#allocation7] sm:$0x1]
    %v2317 = vrot.slane %v2300, 7
    %v2318 = vsel %vm658, %v2317, %v2299
    %v2319 = vrot.slane %v2301, 6
    %v2320 = vsel %vm661, %v2319, %v2318
    %v2321 = vrot.slane %v2302, 5
    %v2322 = vsel %vm664, %v2321, %v2320
    %v2323 = vrot.slane %v2303, 4
    %v2324 = vsel %vm667, %v2323, %v2322
    %v2325 = vrot.slane %v2304, 3
    %v2326 = vsel %vm670, %v2325, %v2324
    %v2327 = vrot.slane %v2305, 2
    %v2328 = vsel %vm673, %v2327, %v2326
    %v2329 = vrot.slane %v2306, 1
    %v2330 = vsel %vm676, %v2329, %v2328
    %2332 = vadd.xlane.f32.xlu0 %v2330
    %v2333 = vpop.xlane.xlu0 %2332
    %v2334 = vmul.f32 %v2333, %v252
    %v2336 = vrot.slane %v2334, 1
    %v2337 = vrot.slane %v2334, 2
    %v2338 = vrot.slane %v2334, 3
    %v2339 = vrot.slane %v2334, 4
    %v2340 = vrot.slane %v2334, 5
    %v2341 = vrot.slane %v2334, 6
    %v2342 = vrot.slane %v2334, 7
    %v2351 = vsub.f32 %v2299, %v2334
    %v2352 = vsub.f32 %v2300, %v2336
    %v2353 = vsub.f32 %v2301, %v2337
    %v2354 = vsub.f32 %v2302, %v2338
    %v2355 = vsub.f32 %v2303, %v2339
    %v2356 = vsub.f32 %v2304, %v2340
    %v2357 = vsub.f32 %v2305, %v2341
    %v2358 = vsub.f32 %v2306, %v2342
    %v2359 = vmul.f32 %v2351, %v2351
    %v2360 = vmul.f32 %v2352, %v2352
    %v2361 = vmul.f32 %v2353, %v2353
    %v2362 = vmul.f32 %v2354, %v2354
    %v2363 = vmul.f32 %v2355, %v2355
    %v2364 = vmul.f32 %v2356, %v2356
    %v2365 = vmul.f32 %v2357, %v2357
    %v2366 = vmul.f32 %v2358, %v2358
    %v2375 = vrot.slane %v2360, 7
    %v2376 = vsel %vm658, %v2375, %v2359
    %v2377 = vrot.slane %v2361, 6
    %v2378 = vsel %vm661, %v2377, %v2376
    %v2379 = vrot.slane %v2362, 5
    %v2380 = vsel %vm664, %v2379, %v2378
    %v2381 = vrot.slane %v2363, 4
    %v2382 = vsel %vm667, %v2381, %v2380
    %v2383 = vrot.slane %v2364, 3
    %v2384 = vsel %vm670, %v2383, %v2382
    %v2385 = vrot.slane %v2365, 2
    %v2386 = vsel %vm673, %v2385, %v2384
    %v2387 = vrot.slane %v2366, 1
    %v2388 = vsel %vm676, %v2387, %v2386
    %2390 = vadd.xlane.f32.xlu0 %v2388
    %v2391 = vpop.xlane.xlu0 %2390
    %v2392 = vmul.f32 %v2391, %v252
    %v2393 = vadd.f32 %v2392, 1e-06
    %v2394 = vrsqrt.pop %v2393
    %v2396 = vrot.slane %v2394, 1
    %v2397 = vrot.slane %v2394, 2
    %v2398 = vrot.slane %v2394, 3
    %v2399 = vrot.slane %v2394, 4
    %v2400 = vrot.slane %v2394, 5
    %v2401 = vrot.slane %v2394, 6
    %v2402 = vrot.slane %v2394, 7
    %v2411 = vmul.f32 %v2351, %v2394
    %v2412 = vmul.f32 %v2352, %v2396
    %v2413 = vmul.f32 %v2353, %v2397
    %v2414 = vmul.f32 %v2354, %v2398
    %v2415 = vmul.f32 %v2355, %v2399
    %v2416 = vmul.f32 %v2356, %v2400
    %v2417 = vmul.f32 %v2357, %v2401
    %v2418 = vmul.f32 %v2358, %v2402
    %v2420 = vlaneseq
    %v2421 = vshrl.u32 %v2420, 7
    %v2422 = vsub.s32 0, %v2421
    %v2423 = vrot.slane %v2307, %v2422
    %v2425 = vmul.f32 %v2411, %v2423
    %v2426 = vmul.f32 %v2412, %v2423
    %v2427 = vmul.f32 %v2413, %v2423
    %v2428 = vmul.f32 %v2414, %v2423
    %v2429 = vmul.f32 %v2415, %v2423
    %v2430 = vmul.f32 %v2416, %v2423
    %v2431 = vmul.f32 %v2417, %v2423
    %v2432 = vmul.f32 %v2418, %v2423
    %v2434 = vlaneseq
    %v2435 = vshrl.u32 %v2434, 7
    %v2436 = vsub.s32 0, %v2435
    %v2437 = vrot.slane %v2308, %v2436
    %v2439 = vadd.f32 %v2425, %v2437
    %v2440 = vadd.f32 %v2426, %v2437
    %v2441 = vadd.f32 %v2427, %v2437
    %v2442 = vadd.f32 %v2428, %v2437
    %v2443 = vadd.f32 %v2429, %v2437
    %v2444 = vadd.f32 %v2430, %v2437
    %v2445 = vadd.f32 %v2431, %v2437
    %v2446 = vadd.f32 %v2432, %v2437
    %v2447 = vpack.c.bf16 %v2439, %v2439
    %v2448 = vpack.c.bf16 %v2440, %v2440
    %v2449 = vpack.c.bf16 %v2441, %v2441
    %v2450 = vpack.c.bf16 %v2442, %v2442
    %v2451 = vpack.c.bf16 %v2443, %v2443
    %v2452 = vpack.c.bf16 %v2444, %v2444
    %v2453 = vpack.c.bf16 %v2445, %v2445
    %v2454 = vpack.c.bf16 %v2446, %v2446
    %v2455 = vld [vmem:[#allocation8] sm:$0xf]
    %v2456 = vld [vmem:[#allocation8 + $0x4] sm:$0xf]
    %v2457 = vld [vmem:[#allocation8 + $0x8] sm:$0xf]
    %v2458 = vld [vmem:[#allocation8 + $0xc] sm:$0xf]
    %v2459 = vld [vmem:[#allocation8 + $0x10] sm:$0xf]
    %v2460 = vld [vmem:[#allocation8 + $0x14] sm:$0xf]
    %v2461 = vld [vmem:[#allocation8 + $0x18] sm:$0xf]
    %v2462 = vld [vmem:[#allocation8 + $0x1c] sm:$0xf]
    %v2463 = vld [vmem:[#allocation8 + $0x20] sm:$0xf]
    %v2464 = vld [vmem:[#allocation8 + $0x24] sm:$0xf]
    %v2465 = vld [vmem:[#allocation8 + $0x28] sm:$0xf]
    %v2466 = vld [vmem:[#allocation8 + $0x2c] sm:$0xf]
    %v2467 = vld [vmem:[#allocation8 + $0x30] sm:$0xf]
    %v2468 = vld [vmem:[#allocation8 + $0x34] sm:$0xf]
    %v2469 = vld [vmem:[#allocation8 + $0x38] sm:$0xf]
    %v2470 = vld [vmem:[#allocation8 + $0x3c] sm:$0xf]
    %v2471 = vld [vmem:[#allocation10] sm:$0x1]
    %v2473 = vlaneseq
    %v2474 = vshrl.u32 %v2473, 7
    %v2475 = vsub.s32 0, %v2474
    %v2476 = vrot.slane %v2471, %v2475
    %v2486 = vunpack.c.l.b16 %v2447
    %v2487 = vunpack.c.l.b16 %v2448
    %v2488 = vunpack.c.l.b16 %v2449
    %v2489 = vunpack.c.l.b16 %v2450
    %v2490 = vunpack.c.l.b16 %v2451
    %v2491 = vunpack.c.l.b16 %v2452
    %v2492 = vunpack.c.l.b16 %v2453
    %v2493 = vunpack.c.l.b16 %v2454
    %v2494 = vrot.slane %v2487, 7
    %v2495 = vsel %vm658, %v2494, %v2486
    %v2496 = vrot.slane %v2488, 6
    %v2497 = vsel %vm661, %v2496, %v2495
    %v2498 = vrot.slane %v2489, 5
    %v2499 = vsel %vm664, %v2498, %v2497
    %v2500 = vrot.slane %v2490, 4
    %v2501 = vsel %vm667, %v2500, %v2499
    %v2502 = vrot.slane %v2491, 3
    %v2503 = vsel %vm670, %v2502, %v2501
    %v2504 = vrot.slane %v2492, 2
    %v2505 = vsel %vm673, %v2504, %v2503
    %v2506 = vrot.slane %v2493, 1
    %v2507 = vsel %vm676, %v2506, %v2505
    %v2508 = vpack.c.b16 %v2507, %v2507
    %v2526 = vunpack.c.l.b16 %v2455
    %v2527 = vunpack.c.l.b16 %v2456
    %v2528 = vunpack.c.l.b16 %v2457
    %v2529 = vunpack.c.l.b16 %v2458
    %v2530 = vunpack.c.l.b16 %v2459
    %v2531 = vunpack.c.l.b16 %v2460
    %v2532 = vunpack.c.l.b16 %v2461
    %v2533 = vunpack.c.l.b16 %v2462
    %v2534 = vunpack.c.l.b16 %v2463
    %v2535 = vunpack.c.l.b16 %v2464
    %v2536 = vunpack.c.l.b16 %v2465
    %v2537 = vunpack.c.l.b16 %v2466
    %v2538 = vunpack.c.l.b16 %v2467
    %v2539 = vunpack.c.l.b16 %v2468
    %v2540 = vunpack.c.l.b16 %v2469
    %v2541 = vunpack.c.l.b16 %v2470
    %v2542 = vpack.c.b16 %v2527, %v2526
    %v2543 = vpack.c.b16 %v2529, %v2528
    %v2544 = vpack.c.b16 %v2531, %v2530
    %v2545 = vpack.c.b16 %v2533, %v2532
    %v2546 = vpack.c.b16 %v2535, %v2534
    %v2547 = vpack.c.b16 %v2537, %v2536
    %v2548 = vpack.c.b16 %v2539, %v2538
    %v2549 = vpack.c.b16 %v2541, %v2540
    %2558 = vmatprep.subr.bf16.mxu0 0
    %2559 = vmatpush1.bf16.msra.mxu0 %v2542
    %2560 = vmatprep.subr.bf16.mxu0 0
    %2561 = vmatpush1.bf16.msra.mxu0 %v2543
    %2562 = vmatprep.subr.bf16.mxu0 0
    %2563 = vmatpush1.bf16.msra.mxu0 %v2544
    %2564 = vmatprep.subr.bf16.mxu0 0
    %2565 = vmatpush1.bf16.msra.mxu0 %v2545
    %2566 = vmatprep.subr.bf16.mxu0 0
    %2567 = vmatpush1.bf16.msra.mxu0 %v2546
    %2568 = vmatprep.subr.bf16.mxu0 0
    %2569 = vmatpush1.bf16.msra.mxu0 %v2547
    %2570 = vmatprep.subr.bf16.mxu0 0
    %2571 = vmatpush1.bf16.msra.mxu0 %v2548
    %2572 = vmatprep.subr.bf16.mxu0 0
    %2573 = vmatpush1.bf16.msra.mxu0 %v2549
    %2574 = vmatprep.subr.bf16.mxu0 0
    %2575 = vmatpush1.bf16.msra.mxu0 0
    %2576 = vmatprep.subr.bf16.mxu0 0
    %2577 = vmatpush1.bf16.msra.mxu0 0
    %2578 = vmatprep.subr.bf16.mxu0 0
    %2579 = vmatpush1.bf16.msra.mxu0 0
    %2580 = vmatprep.subr.bf16.mxu0 0
    %2581 = vmatpush1.bf16.msra.mxu0 0
    %2582 = vmatprep.subr.bf16.mxu0 0
    %2583 = vmatpush1.bf16.msra.mxu0 0
    %2584 = vmatprep.subr.bf16.mxu0 0
    %2585 = vmatpush1.bf16.msra.mxu0 0
    %2586 = vmatprep.subr.bf16.mxu0 0
    %2587 = vmatpush1.bf16.msra.mxu0 0
    %2588 = vmatprep.subr.bf16.mxu0 0
    %2589 = vmatpush1.bf16.msra.mxu0 0
    %2590 = vmatprep.mubr.bf16.mxu0 0
    %2591 = vmatmul.mubr.bf16.gmra.mrb[0].mxu0 %v2508
    %v2592 = vpop.f32.mrb[0].mxu0
    %v2593 = vadd.f32 %v2476, %v2592
    %v2594 = vpop.f32.mrb[0].mxu0
    %v2595 = vpop.f32.mrb[0].mxu0
    %v2596 = vpop.f32.mrb[0].mxu0
    %2597 = vdwg.mxu0
    %v2598 = vmax.f32 %v2593, 0.0
    %v2600 = vrot.slane %v2598, 1
    %v2601 = vrot.slane %v2598, 2
    %v2602 = vrot.slane %v2598, 3
    %v2603 = vrot.slane %v2598, 4
    %v2604 = vrot.slane %v2598, 5
    %v2605 = vrot.slane %v2598, 6
    %v2606 = vrot.slane %v2598, 7
    %v2615 = vadd.f32 %v2299, %v2598
    %v2616 = vadd.f32 %v2300, %v2600
    %v2617 = vadd.f32 %v2301, %v2601
    %v2618 = vadd.f32 %v2302, %v2602
    %v2619 = vadd.f32 %v2303, %v2603
    %v2620 = vadd.f32 %v2304, %v2604
    %v2621 = vadd.f32 %v2305, %v2605
    %v2622 = vadd.f32 %v2306, %v2606
    %v2623 = vld [vmem:[#allocation11] sm:$0x1]
    %v2624 = vld [vmem:[#allocation13] sm:$0x1]
    %v2633 = vrot.slane %v2616, 7
    %v2634 = vsel %vm658, %v2633, %v2615
    %v2635 = vrot.slane %v2617, 6
    %v2636 = vsel %vm661, %v2635, %v2634
    %v2637 = vrot.slane %v2618, 5
    %v2638 = vsel %vm664, %v2637, %v2636
    %v2639 = vrot.slane %v2619, 4
    %v2640 = vsel %vm667, %v2639, %v2638
    %v2641 = vrot.slane %v2620, 3
    %v2642 = vsel %vm670, %v2641, %v2640
    %v2643 = vrot.slane %v2621, 2
    %v2644 = vsel %vm673, %v2643, %v2642
    %v2645 = vrot.slane %v2622, 1
    %v2646 = vsel %vm676, %v2645, %v2644
    %2648 = vadd.xlane.f32.xlu0 %v2646
    %v2649 = vpop.xlane.xlu0 %2648
    %v2650 = vmul.f32 %v2649, %v252
    %v2652 = vrot.slane %v2650, 1
    %v2653 = vrot.slane %v2650, 2
    %v2654 = vrot.slane %v2650, 3
    %v2655 = vrot.slane %v2650, 4
    %v2656 = vrot.slane %v2650, 5
    %v2657 = vrot.slane %v2650, 6
    %v2658 = vrot.slane %v2650, 7
    %v2667 = vsub.f32 %v2615, %v2650
    %v2668 = vsub.f32 %v2616, %v2652
    %v2669 = vsub.f32 %v2617, %v2653
    %v2670 = vsub.f32 %v2618, %v2654
    %v2671 = vsub.f32 %v2619, %v2655
    %v2672 = vsub.f32 %v2620, %v2656
    %v2673 = vsub.f32 %v2621, %v2657
    %v2674 = vsub.f32 %v2622, %v2658
    %v2675 = vmul.f32 %v2667, %v2667
    %v2676 = vmul.f32 %v2668, %v2668
    %v2677 = vmul.f32 %v2669, %v2669
    %v2678 = vmul.f32 %v2670, %v2670
    %v2679 = vmul.f32 %v2671, %v2671
    %v2680 = vmul.f32 %v2672, %v2672
    %v2681 = vmul.f32 %v2673, %v2673
    %v2682 = vmul.f32 %v2674, %v2674
    %v2691 = vrot.slane %v2676, 7
    %v2692 = vsel %vm658, %v2691, %v2675
    %v2693 = vrot.slane %v2677, 6
    %v2694 = vsel %vm661, %v2693, %v2692
    %v2695 = vrot.slane %v2678, 5
    %v2696 = vsel %vm664, %v2695, %v2694
    %v2697 = vrot.slane %v2679, 4
    %v2698 = vsel %vm667, %v2697, %v2696
    %v2699 = vrot.slane %v2680, 3
    %v2700 = vsel %vm670, %v2699, %v2698
    %v2701 = vrot.slane %v2681, 2
    %v2702 = vsel %vm673, %v2701, %v2700
    %v2703 = vrot.slane %v2682, 1
    %v2704 = vsel %vm676, %v2703, %v2702
    %2706 = vadd.xlane.f32.xlu0 %v2704
    %v2707 = vpop.xlane.xlu0 %2706
    %v2708 = vmul.f32 %v2707, %v252
    %v2709 = vadd.f32 %v2708, 1e-06
    %v2710 = vrsqrt.pop %v2709
    %v2712 = vrot.slane %v2710, 1
    %v2713 = vrot.slane %v2710, 2
    %v2714 = vrot.slane %v2710, 3
    %v2715 = vrot.slane %v2710, 4
    %v2716 = vrot.slane %v2710, 5
    %v2717 = vrot.slane %v2710, 6
    %v2718 = vrot.slane %v2710, 7
    %v2727 = vmul.f32 %v2667, %v2710
    %v2728 = vmul.f32 %v2668, %v2712
    %v2729 = vmul.f32 %v2669, %v2713
    %v2730 = vmul.f32 %v2670, %v2714
    %v2731 = vmul.f32 %v2671, %v2715
    %v2732 = vmul.f32 %v2672, %v2716
    %v2733 = vmul.f32 %v2673, %v2717
    %v2734 = vmul.f32 %v2674, %v2718
    %v2736 = vlaneseq
    %v2737 = vshrl.u32 %v2736, 7
    %v2738 = vsub.s32 0, %v2737
    %v2739 = vrot.slane %v2623, %v2738
    %v2741 = vmul.f32 %v2727, %v2739
    %v2742 = vmul.f32 %v2728, %v2739
    %v2743 = vmul.f32 %v2729, %v2739
    %v2744 = vmul.f32 %v2730, %v2739
    %v2745 = vmul.f32 %v2731, %v2739
    %v2746 = vmul.f32 %v2732, %v2739
    %v2747 = vmul.f32 %v2733, %v2739
    %v2748 = vmul.f32 %v2734, %v2739
    %v2750 = vlaneseq
    %v2751 = vshrl.u32 %v2750, 7
    %v2752 = vsub.s32 0, %v2751
    %v2753 = vrot.slane %v2624, %v2752
    %v2755 = vadd.f32 %v2741, %v2753
    %v2756 = vadd.f32 %v2742, %v2753
    %v2757 = vadd.f32 %v2743, %v2753
    %v2758 = vadd.f32 %v2744, %v2753
    %v2759 = vadd.f32 %v2745, %v2753
    %v2760 = vadd.f32 %v2746, %v2753
    %v2761 = vadd.f32 %v2747, %v2753
    %v2762 = vadd.f32 %v2748, %v2753
    %v2763 = vld [vmem:[#allocation14] sm:$0x1]
    %v2764 = vld [vmem:[#allocation16] sm:$0x1]
    %v2773 = vrot.slane %v2756, 7
    %v2774 = vsel %vm658, %v2773, %v2755
    %v2775 = vrot.slane %v2757, 6
    %v2776 = vsel %vm661, %v2775, %v2774
    %v2777 = vrot.slane %v2758, 5
    %v2778 = vsel %vm664, %v2777, %v2776
    %v2779 = vrot.slane %v2759, 4
    %v2780 = vsel %vm667, %v2779, %v2778
    %v2781 = vrot.slane %v2760, 3
    %v2782 = vsel %vm670, %v2781, %v2780
    %v2783 = vrot.slane %v2761, 2
    %v2784 = vsel %vm673, %v2783, %v2782
    %v2785 = vrot.slane %v2762, 1
    %v2786 = vsel %vm676, %v2785, %v2784
    %2788 = vadd.xlane.f32.xlu0 %v2786
    %v2789 = vpop.xlane.xlu0 %2788
    %v2790 = vmul.f32 %v2789, %v252
    %v2792 = vrot.slane %v2790, 1
    %v2793 = vrot.slane %v2790, 2
    %v2794 = vrot.slane %v2790, 3
    %v2795 = vrot.slane %v2790, 4
    %v2796 = vrot.slane %v2790, 5
    %v2797 = vrot.slane %v2790, 6
    %v2798 = vrot.slane %v2790, 7
    %v2807 = vsub.f32 %v2755, %v2790
    %v2808 = vsub.f32 %v2756, %v2792
    %v2809 = vsub.f32 %v2757, %v2793
    %v2810 = vsub.f32 %v2758, %v2794
    %v2811 = vsub.f32 %v2759, %v2795
    %v2812 = vsub.f32 %v2760, %v2796
    %v2813 = vsub.f32 %v2761, %v2797
    %v2814 = vsub.f32 %v2762, %v2798
    %v2815 = vmul.f32 %v2807, %v2807
    %v2816 = vmul.f32 %v2808, %v2808
    %v2817 = vmul.f32 %v2809, %v2809
    %v2818 = vmul.f32 %v2810, %v2810
    %v2819 = vmul.f32 %v2811, %v2811
    %v2820 = vmul.f32 %v2812, %v2812
    %v2821 = vmul.f32 %v2813, %v2813
    %v2822 = vmul.f32 %v2814, %v2814
    %v2831 = vrot.slane %v2816, 7
    %v2832 = vsel %vm658, %v2831, %v2815
    %v2833 = vrot.slane %v2817, 6
    %v2834 = vsel %vm661, %v2833, %v2832
    %v2835 = vrot.slane %v2818, 5
    %v2836 = vsel %vm664, %v2835, %v2834
    %v2837 = vrot.slane %v2819, 4
    %v2838 = vsel %vm667, %v2837, %v2836
    %v2839 = vrot.slane %v2820, 3
    %v2840 = vsel %vm670, %v2839, %v2838
    %v2841 = vrot.slane %v2821, 2
    %v2842 = vsel %vm673, %v2841, %v2840
    %v2843 = vrot.slane %v2822, 1
    %v2844 = vsel %vm676, %v2843, %v2842
    %2846 = vadd.xlane.f32.xlu0 %v2844
    %v2847 = vpop.xlane.xlu0 %2846
    %v2848 = vmul.f32 %v2847, %v252
    %v2849 = vadd.f32 %v2848, 1e-06
    %v2850 = vrsqrt.pop %v2849
    %v2852 = vrot.slane %v2850, 1
    %v2853 = vrot.slane %v2850, 2
    %v2854 = vrot.slane %v2850, 3
    %v2855 = vrot.slane %v2850, 4
    %v2856 = vrot.slane %v2850, 5
    %v2857 = vrot.slane %v2850, 6
    %v2858 = vrot.slane %v2850, 7
    %v2867 = vmul.f32 %v2807, %v2850
    %v2868 = vmul.f32 %v2808, %v2852
    %v2869 = vmul.f32 %v2809, %v2853
    %v2870 = vmul.f32 %v2810, %v2854
    %v2871 = vmul.f32 %v2811, %v2855
    %v2872 = vmul.f32 %v2812, %v2856
    %v2873 = vmul.f32 %v2813, %v2857
    %v2874 = vmul.f32 %v2814, %v2858
    %v2876 = vlaneseq
    %v2877 = vshrl.u32 %v2876, 7
    %v2878 = vsub.s32 0, %v2877
    %v2879 = vrot.slane %v2763, %v2878
    %v2881 = vmul.f32 %v2867, %v2879
    %v2882 = vmul.f32 %v2868, %v2879
    %v2883 = vmul.f32 %v2869, %v2879
    %v2884 = vmul.f32 %v2870, %v2879
    %v2885 = vmul.f32 %v2871, %v2879
    %v2886 = vmul.f32 %v2872, %v2879
    %v2887 = vmul.f32 %v2873, %v2879
    %v2888 = vmul.f32 %v2874, %v2879
    %v2890 = vlaneseq
    %v2891 = vshrl.u32 %v2890, 7
    %v2892 = vsub.s32 0, %v2891
    %v2893 = vrot.slane %v2764, %v2892
    %v2895 = vadd.f32 %v2881, %v2893
    %v2896 = vadd.f32 %v2882, %v2893
    %v2897 = vadd.f32 %v2883, %v2893
    %v2898 = vadd.f32 %v2884, %v2893
    %v2899 = vadd.f32 %v2885, %v2893
    %v2900 = vadd.f32 %v2886, %v2893
    %v2901 = vadd.f32 %v2887, %v2893
    %v2902 = vadd.f32 %v2888, %v2893
    %v2903 = vpack.c.bf16 %v2895, %v2895
    %v2904 = vpack.c.bf16 %v2896, %v2896
    %v2905 = vpack.c.bf16 %v2897, %v2897
    %v2906 = vpack.c.bf16 %v2898, %v2898
    %v2907 = vpack.c.bf16 %v2899, %v2899
    %v2908 = vpack.c.bf16 %v2900, %v2900
    %v2909 = vpack.c.bf16 %v2901, %v2901
    %v2910 = vpack.c.bf16 %v2902, %v2902
    %v2911 = vld [vmem:[#allocation17] sm:$0xf]
    %v2912 = vld [vmem:[#allocation17 + $0x4] sm:$0xf]
    %v2913 = vld [vmem:[#allocation17 + $0x8] sm:$0xf]
    %v2914 = vld [vmem:[#allocation17 + $0xc] sm:$0xf]
    %v2915 = vld [vmem:[#allocation17 + $0x10] sm:$0xf]
    %v2916 = vld [vmem:[#allocation17 + $0x14] sm:$0xf]
    %v2917 = vld [vmem:[#allocation17 + $0x18] sm:$0xf]
    %v2918 = vld [vmem:[#allocation17 + $0x1c] sm:$0xf]
    %v2919 = vld [vmem:[#allocation17 + $0x20] sm:$0xf]
    %v2920 = vld [vmem:[#allocation17 + $0x24] sm:$0xf]
    %v2921 = vld [vmem:[#allocation17 + $0x28] sm:$0xf]
    %v2922 = vld [vmem:[#allocation17 + $0x2c] sm:$0xf]
    %v2923 = vld [vmem:[#allocation17 + $0x30] sm:$0xf]
    %v2924 = vld [vmem:[#allocation17 + $0x34] sm:$0xf]
    %v2925 = vld [vmem:[#allocation17 + $0x38] sm:$0xf]
    %v2926 = vld [vmem:[#allocation17 + $0x3c] sm:$0xf]
    %v2927 = vld [vmem:[#allocation19] sm:$0x1]
    %v2929 = vlaneseq
    %v2930 = vshrl.u32 %v2929, 7
    %v2931 = vsub.s32 0, %v2930
    %v2932 = vrot.slane %v2927, %v2931
    %v2942 = vunpack.c.l.b16 %v2903
    %v2943 = vunpack.c.l.b16 %v2904
    %v2944 = vunpack.c.l.b16 %v2905
    %v2945 = vunpack.c.l.b16 %v2906
    %v2946 = vunpack.c.l.b16 %v2907
    %v2947 = vunpack.c.l.b16 %v2908
    %v2948 = vunpack.c.l.b16 %v2909
    %v2949 = vunpack.c.l.b16 %v2910
    %v2950 = vrot.slane %v2943, 7
    %v2951 = vsel %vm658, %v2950, %v2942
    %v2952 = vrot.slane %v2944, 6
    %v2953 = vsel %vm661, %v2952, %v2951
    %v2954 = vrot.slane %v2945, 5
    %v2955 = vsel %vm664, %v2954, %v2953
    %v2956 = vrot.slane %v2946, 4
    %v2957 = vsel %vm667, %v2956, %v2955
    %v2958 = vrot.slane %v2947, 3
    %v2959 = vsel %vm670, %v2958, %v2957
    %v2960 = vrot.slane %v2948, 2
    %v2961 = vsel %vm673, %v2960, %v2959
    %v2962 = vrot.slane %v2949, 1
    %v2963 = vsel %vm676, %v2962, %v2961
    %v2964 = vpack.c.b16 %v2963, %v2963
    %v2982 = vunpack.c.l.b16 %v2911
    %v2983 = vunpack.c.l.b16 %v2912
    %v2984 = vunpack.c.l.b16 %v2913
    %v2985 = vunpack.c.l.b16 %v2914
    %v2986 = vunpack.c.l.b16 %v2915
    %v2987 = vunpack.c.l.b16 %v2916
    %v2988 = vunpack.c.l.b16 %v2917
    %v2989 = vunpack.c.l.b16 %v2918
    %v2990 = vunpack.c.l.b16 %v2919
    %v2991 = vunpack.c.l.b16 %v2920
    %v2992 = vunpack.c.l.b16 %v2921
    %v2993 = vunpack.c.l.b16 %v2922
    %v2994 = vunpack.c.l.b16 %v2923
    %v2995 = vunpack.c.l.b16 %v2924
    %v2996 = vunpack.c.l.b16 %v2925
    %v2997 = vunpack.c.l.b16 %v2926
    %v2998 = vpack.c.b16 %v2983, %v2982
    %v2999 = vpack.c.b16 %v2985, %v2984
    %v3000 = vpack.c.b16 %v2987, %v2986
    %v3001 = vpack.c.b16 %v2989, %v2988
    %v3002 = vpack.c.b16 %v2991, %v2990
    %v3003 = vpack.c.b16 %v2993, %v2992
    %v3004 = vpack.c.b16 %v2995, %v2994
    %v3005 = vpack.c.b16 %v2997, %v2996
    %3014 = vmatprep.subr.bf16.mxu0 0
    %3015 = vmatpush1.bf16.msra.mxu0 %v2998
    %3016 = vmatprep.subr.bf16.mxu0 0
    %3017 = vmatpush1.bf16.msra.mxu0 %v2999
    %3018 = vmatprep.subr.bf16.mxu0 0
    %3019 = vmatpush1.bf16.msra.mxu0 %v3000
    %3020 = vmatprep.subr.bf16.mxu0 0
    %3021 = vmatpush1.bf16.msra.mxu0 %v3001
    %3022 = vmatprep.subr.bf16.mxu0 0
    %3023 = vmatpush1.bf16.msra.mxu0 %v3002
    %3024 = vmatprep.subr.bf16.mxu0 0
    %3025 = vmatpush1.bf16.msra.mxu0 %v3003
    %3026 = vmatprep.subr.bf16.mxu0 0
    %3027 = vmatpush1.bf16.msra.mxu0 %v3004
    %3028 = vmatprep.subr.bf16.mxu0 0
    %3029 = vmatpush1.bf16.msra.mxu0 %v3005
    %3030 = vmatprep.subr.bf16.mxu0 0
    %3031 = vmatpush1.bf16.msra.mxu0 0
    %3032 = vmatprep.subr.bf16.mxu0 0
    %3033 = vmatpush1.bf16.msra.mxu0 0
    %3034 = vmatprep.subr.bf16.mxu0 0
    %3035 = vmatpush1.bf16.msra.mxu0 0
    %3036 = vmatprep.subr.bf16.mxu0 0
    %3037 = vmatpush1.bf16.msra.mxu0 0
    %3038 = vmatprep.subr.bf16.mxu0 0
    %3039 = vmatpush1.bf16.msra.mxu0 0
    %3040 = vmatprep.subr.bf16.mxu0 0
    %3041 = vmatpush1.bf16.msra.mxu0 0
    %3042 = vmatprep.subr.bf16.mxu0 0
    %3043 = vmatpush1.bf16.msra.mxu0 0
    %3044 = vmatprep.subr.bf16.mxu0 0
    %3045 = vmatpush1.bf16.msra.mxu0 0
    %3046 = vmatprep.mubr.bf16.mxu0 0
    %3047 = vmatmul.mubr.bf16.gmra.mrb[0].mxu0 %v2964
    %v3048 = vpop.f32.mrb[0].mxu0
    %v3049 = vadd.f32 %v2932, %v3048
    %v3050 = vpop.f32.mrb[0].mxu0
    %v3051 = vpop.f32.mrb[0].mxu0
    %v3052 = vpop.f32.mrb[0].mxu0
    %3053 = vdwg.mxu0
    %3054 = vst [vmem:[#allocation20] sm:$0xff] %v3049
    // Predicated region
    $region126: #{transformer_forward.1} parent=1 // pred_check
      _
    $region127: #{transformer_forward.1} parent=1 // pred_check_branch
      %3056 = sbr.rel (0) target = $region129
    $region128: #{transformer_forward.1} parent=1 // pred_region
      %s3058 = ssub.s32 128, 128
      %3059 = vsyncadd [#allocation4], %s3058
      %s3061 = sshll.u32 [#allocation20], 4
      %s3062 = int_to_ptr.vmem [resolvable:$true] %s3061
      %3064 = dma.vmem_to_hbm [thread:$0]  %s3062, 128, %s20, [#allocation4]
    $region129: #{transformer_forward.1} parent=1 // pred_fallthru
      _
    // Predicated region
    $region130: #{transformer_forward.1} parent=1 // pred_check
      _
    $region131: #{transformer_forward.1} parent=1 // pred_check_branch
      %3066 = sbr.rel (0) target = $region133
    $region132: #{transformer_forward.1} parent=1 // pred_region
      %3067 = dma.done [#allocation4], 128
    $region133: #{transformer_forward.1} parent=1 // pred_fallthru
      _
    %3068 = vsyncpa [#allocation3], 1
    %3069 = vsyncpa [#allocation6], 1
    %3070 = vsyncpa [#allocation9], 1
    %3071 = vsyncpa [#allocation12], 1
    %3072 = vsyncpa [#allocation15], 1
    %3073 = vsyncpa [#allocation18], 1
    %3074 = vsyncpa [#allocation4], 1

</llo_original>
